<compile_context>
chip_gen: v7x
topology: tpu7x:2x2x1
jax: 0.10.0
libtpu: 0.0.40
codegen_flags: <defaults>
</compile_context>

<pallas_src>
import functools

import jax
import jax.numpy as jnp
from jax.experimental import pallas as pl
from jax.experimental.pallas import tpu as pltpu


def _channel_attention_kernel(x_ref, w1_ref, w2_ref, out_ref,
                              sum_acc, max_acc, *, S, TS, needs_mask):
    # x_ref:  [1, C, TS]  current spatial tile of one batch element
    # w1_ref: [Cr, C]     fc1 weight (Conv3d 1x1x1 weight, squeezed)
    # w2_ref: [C, Cr]     fc2 weight (Conv3d 1x1x1 weight, squeezed)
    # out_ref: [1, 1, C]
    # sum_acc / max_acc: [1, C] f32 VMEM scratch accumulators
    s = pl.program_id(1)
    num_s = pl.num_programs(1)

    @pl.when(s == 0)
    def _init():
        sum_acc[...] = jnp.zeros_like(sum_acc)
        max_acc[...] = jnp.full_like(max_acc, -jnp.inf)

    # Load the tile once; feed both reductions from the same vregs.
    x = x_ref[...].astype(jnp.float32)                       # [1, C, TS]

    def _accumulate(x_sum, x_max):
        # Raw sum per tile (divide by S only once, in the epilogue).
        sum_acc[...] += jnp.sum(x_sum, axis=-1)              # [1, C]
        max_acc[...] = jnp.maximum(max_acc[...], jnp.max(x_max, axis=-1))

    if needs_mask:
        # Only the last tile can run past S -> keep the hot path unmasked.
        @pl.when(s < num_s - 1)
        def _full_tile():
            _accumulate(x, x)

        @pl.when(s == num_s - 1)
        def _partial_tile():
            pos = s * TS + jax.lax.broadcasted_iota(jnp.int32, (1, 1, TS), 2)
            valid = pos < S                                  # broadcasts over C
            _accumulate(jnp.where(valid, x, 0.0),
                        jnp.where(valid, x, -jnp.inf))
    else:
        _accumulate(x, x)

    @pl.when(s == num_s - 1)
    def _finalize():
        avg = sum_acc[...] * (1.0 / S)                       # [1, C]
        mx = max_acc[...]                                    # [1, C]
        pooled = jnp.concatenate([avg, mx], axis=0)          # [2, C] fused branches

        w1 = w1_ref[...].astype(jnp.float32)                 # [Cr, C]
        w2 = w2_ref[...].astype(jnp.float32)                 # [C, Cr]

        # fc1: contract C (axis 1 of pooled with axis 1 of w1) -> [2, Cr]
        h = jax.lax.dot_general(pooled, w1, (((1,), (1,)), ((), ())),
                                preferred_element_type=jnp.float32)
        h = jnp.maximum(h, 0.0)                              # ReLU
        # fc2: contract Cr (axis 1 of h with axis 1 of w2) -> [2, C]
        y = jax.lax.dot_general(h, w2, (((1,), (1,)), ((), ())),
                                preferred_element_type=jnp.float32)

        out = jax.nn.sigmoid(y[0:1, :] + y[1:2, :])          # [1, C]
        out_ref[...] = out.reshape(out_ref.shape).astype(out_ref.dtype)


def _choose_spatial_tile(C, S, itemsize, budget_bytes=8 * 1024 * 1024):
    """Pick TS so one double-buffered (1, C, TS) x tile stays under budget."""
    max_ts = budget_bytes // max(1, 2 * C * itemsize)
    if S <= max_ts:
        return S                       # one full-width tile (always legal)
    return max(128, (max_ts // 128) * 128)


def channel_attention(x, w_fc1, w_fc2, *, tile_s=None,
                      vmem_limit_bytes=32 * 1024 * 1024):
    """ChannelAttention forward.

    x:      [B, C, D, H, W]
    w_fc1:  [Cr, C]  (Conv3d fc1 weight with the 1x1x1 kernel dims squeezed)
    w_fc2:  [C, Cr]  (Conv3d fc2 weight with the 1x1x1 kernel dims squeezed)
    Returns [B, C, 1, 1, 1], matching the PyTorch module.
    """
    B, C, D, H, W = x.shape
    S = D * H * W
    x_flat = x.reshape(B, C, S)
    itemsize = jnp.dtype(x.dtype).itemsize

    if tile_s is None:
        tile_s = _choose_spatial_tile(C, S, itemsize)
    if tile_s >= S:
        tile_s = S                     # full spatial extent -> always a legal block
    else:
        tile_s = max(128, (tile_s // 128) * 128)   # lane-dim multiple of 128
    num_s = pl.cdiv(S, tile_s)
    needs_mask = (S % tile_s) != 0

    kernel = functools.partial(_channel_attention_kernel,
                               S=S, TS=tile_s, needs_mask=needs_mask)

    out = pl.pallas_call(
        kernel,
        out_shape=jax.ShapeDtypeStruct((B, 1, C), x.dtype),
        grid_spec=pltpu.PrefetchScalarGridSpec(
            num_scalar_prefetch=0,
            grid=(B, num_s),
            in_specs=[
                pl.BlockSpec((1, C, tile_s), lambda b, s: (b, 0, s)),
                pl.BlockSpec(w_fc1.shape, lambda b, s: (0, 0)),
                pl.BlockSpec(w_fc2.shape, lambda b, s: (0, 0)),
            ],
            out_specs=pl.BlockSpec((1, 1, C), lambda b, s: (b, 0, 0)),
            scratch_shapes=[
                pltpu.VMEM((1, C), jnp.float32),   # running sum
                pltpu.VMEM((1, C), jnp.float32),   # running max
            ],
        ),
        compiler_params=pltpu.CompilerParams(
            dimension_semantics=("parallel", "arbitrary"),
            vmem_limit_bytes=vmem_limit_bytes,
        ),
    )(x_flat, w_fc1, w_fc2)

    return out.reshape(B, C, 1, 1, 1)


def reference(x, w_fc1, w_fc2):
    # Pure-JAX reference of the PyTorch ChannelAttention forward.
    avg = jnp.mean(x, axis=(2, 3, 4))            # [B, C]
    mx = jnp.max(x, axis=(2, 3, 4))              # [B, C]

    def mlp(p):
        h = jnp.maximum(p @ w_fc1.T, 0.0)
        return h @ w_fc2.T

    out = jax.nn.sigmoid(mlp(avg) + mlp(mx))
    return out.reshape(*out.shape, 1, 1, 1)


if __name__ == "__main__":
    B, C = 2, 32                        # inChan = 32 in the PyTorch module
    D, H, W = 3, 8, 12                  # S = 288: not a multiple of 128 ->
    reduction_ratio = 16                #          exercises the masked last tile
    Cr = C // reduction_ratio           # 2

    key = jax.random.PRNGKey(0)
    kx, k1, k2 = jax.random.split(key, 3)

    x = jax.random.normal(kx, (B, C, D, H, W), dtype=jnp.float32)
    # Conv3d 1x1x1 weights with the kernel dims squeezed:
    #   fc1.weight [Cr, C, 1, 1, 1] -> [Cr, C];  fc2.weight [C, Cr, 1, 1, 1] -> [C, Cr]
    w_fc1 = jax.random.normal(k1, (Cr, C), dtype=jnp.float32) * 0.1
    w_fc2 = jax.random.normal(k2, (C, Cr), dtype=jnp.float32) * 0.1

    ref = reference(x, w_fc1, w_fc2)

    # 1) Forced small tile: multi-step spatial reduction + masked partial tile.
    out_tiled = channel_attention(x, w_fc1, w_fc2, tile_s=128)
    out_tiled = jax.block_until_ready(out_tiled)
    assert out_tiled.shape == (B, C, 1, 1, 1), out_tiled.shape
    assert jnp.allclose(out_tiled, ref, atol=1e-5, rtol=1e-5), (
        float(jnp.max(jnp.abs(out_tiled - ref))))

    # 2) Auto tile selection (single full-width tile at this small shape).
    out_auto = channel_attention(x, w_fc1, w_fc2)
    out_auto = jax.block_until_ready(out_auto)
    assert jnp.allclose(out_auto, ref, atol=1e-5, rtol=1e-5), (
        float(jnp.max(jnp.abs(out_auto - ref))))

    print("KERNEL_OK")
</pallas_src>

<mosaic_0001>
module attributes {stable_mosaic.version = 11 : i64} {
  func.func @_channel_attention_kernel(%arg0: i32, %arg1: i32, %arg2: memref<1x32x128xf32, #tpu.memory_space<vmem>>, %arg3: memref<2x32xf32, #tpu.memory_space<vmem>>, %arg4: memref<32x2xf32, #tpu.memory_space<vmem>>, %arg5: memref<1x1x32xf32, #tpu.memory_space<vmem>>, %arg6: memref<1x32xf32, #tpu.memory_space<vmem>>, %arg7: memref<1x32xf32, #tpu.memory_space<vmem>>) attributes {dimension_semantics = [#tpu.dimension_semantics<parallel>, #tpu.dimension_semantics<arbitrary>], iteration_bounds = array<i64: 2, 3>, scalar_prefetch = 0 : i64, scratch_operands = 2 : i64, tpu.core_type = #tpu.core_type<tc>, window_params = [{transform_indices = @transform_0, window_bounds = array<i64: 1, 32, 128>}, {pipeline_mode = #tpu.pipeline_mode<synchronous>, transform_indices = @transform_1, window_bounds = array<i64: 2, 32>}, {pipeline_mode = #tpu.pipeline_mode<synchronous>, transform_indices = @transform_2, window_bounds = array<i64: 32, 2>}, {transform_indices = @transform_3, window_bounds = array<i64: 1, 1, 32>}]} {
    %c0_i32 = arith.constant 0 : i32
    %0 = arith.cmpi eq, %arg1, %c0_i32 : i32
    %1 = arith.extui %0 : i1 to i32
    %c0_i32_0 = arith.constant 0 : i32
    %2 = arith.cmpi ne, %1, %c0_i32_0 : i32
    scf.if %2 {
      %cst = arith.constant 0.000000e+00 : f32
      %13 = vector.broadcast %cst : f32 to vector<1x32xf32>
      %c0_8 = arith.constant 0 : index
      %c0_9 = arith.constant 0 : index
      %14 = vector.load %arg6[%c0_8, %c0_9] : memref<1x32xf32, #tpu.memory_space<vmem>>, vector<1x32xf32>
      tpu.vector_store %arg6[%c0_8, %c0_9], %13 {strides = array<i32>} : memref<1x32xf32, #tpu.memory_space<vmem>>, vector<1x32xf32>,
      %cst_10 = arith.constant 0xFF800000 : f32
      %15 = vector.broadcast %cst_10 : f32 to vector<1x32xf32>
      %c0_11 = arith.constant 0 : index
      %c0_12 = arith.constant 0 : index
      %16 = vector.load %arg7[%c0_11, %c0_12] : memref<1x32xf32, #tpu.memory_space<vmem>>, vector<1x32xf32>
      tpu.vector_store %arg7[%c0_11, %c0_12], %15 {strides = array<i32>} : memref<1x32xf32, #tpu.memory_space<vmem>>, vector<1x32xf32>,
    } else {
    }
    %c0 = arith.constant 0 : index
    %c0_1 = arith.constant 0 : index
    %c0_2 = arith.constant 0 : index
    %3 = vector.load %arg2[%c0, %c0_1, %c0_2] : memref<1x32x128xf32, #tpu.memory_space<vmem>>, vector<1x32x128xf32>
    %c2_i32 = arith.constant 2 : i32
    %4 = arith.cmpi slt, %arg1, %c2_i32 : i32
    %5 = arith.extui %4 : i1 to i32
    %c0_i32_3 = arith.constant 0 : i32
    %6 = arith.cmpi ne, %5, %c0_i32_3 : i32
    scf.if %6 {
      %c0_8 = arith.constant 0 : index
      %c0_9 = arith.constant 0 : index
      %13 = vector.load %arg6[%c0_8, %c0_9] : memref<1x32xf32, #tpu.memory_space<vmem>>, vector<1x32xf32>
      %cst = arith.constant dense<0.000000e+00> : vector<1x32xf32>
      %14 = vector.multi_reduction <add>, %3, %cst [2] : vector<1x32x128xf32> to vector<1x32xf32>
      %15 = arith.addf %13, %14 : vector<1x32xf32>
      %c0_10 = arith.constant 0 : index
      %c0_11 = arith.constant 0 : index
      %16 = vector.load %arg6[%c0_10, %c0_11] : memref<1x32xf32, #tpu.memory_space<vmem>>, vector<1x32xf32>
      tpu.vector_store %arg6[%c0_10, %c0_11], %15 {strides = array<i32>} : memref<1x32xf32, #tpu.memory_space<vmem>>, vector<1x32xf32>,
      %c0_12 = arith.constant 0 : index
      %c0_13 = arith.constant 0 : index
      %17 = vector.load %arg7[%c0_12, %c0_13] : memref<1x32xf32, #tpu.memory_space<vmem>>, vector<1x32xf32>
      %cst_14 = arith.constant dense<0xFF800000> : vector<1x32xf32>
      %18 = vector.multi_reduction <maximumf>, %3, %cst_14 [2] : vector<1x32x128xf32> to vector<1x32xf32>
      %19 = arith.maximumf %17, %18 : vector<1x32xf32>
      %c0_15 = arith.constant 0 : index
      %c0_16 = arith.constant 0 : index
      %20 = vector.load %arg7[%c0_15, %c0_16] : memref<1x32xf32, #tpu.memory_space<vmem>>, vector<1x32xf32>
      tpu.vector_store %arg7[%c0_15, %c0_16], %19 {strides = array<i32>} : memref<1x32xf32, #tpu.memory_space<vmem>>, vector<1x32xf32>,
    } else {
    }
    %c2_i32_4 = arith.constant 2 : i32
    %7 = arith.cmpi eq, %arg1, %c2_i32_4 : i32
    %8 = arith.extui %7 : i1 to i32
    %c0_i32_5 = arith.constant 0 : i32
    %9 = arith.cmpi ne, %8, %c0_i32_5 : i32
    scf.if %9 {
      %c128_i32 = arith.constant 128 : i32
      %13 = arith.muli %arg1, %c128_i32 : i32
      %14 = tpu.iota {dimensions = array<i32: 2>} : vector<1x1x128xi32>
      %15 = vector.broadcast %13 : i32 to vector<1x1x128xi32>
      %16 = arith.addi %15, %14 : vector<1x1x128xi32>
      %c288_i32 = arith.constant 288 : i32
      %17 = vector.broadcast %c288_i32 : i32 to vector<1x1x128xi32>
      %18 = arith.cmpi slt, %16, %17 : vector<1x1x128xi32>
      %cst = arith.constant 0.000000e+00 : f32
      %19 = vector.shape_cast %18 : vector<1x1x128xi1> to vector<1x1x128xi1>
      %20 = vector.broadcast %19 : vector<1x1x128xi1> to vector<1x32x128xi1>
      %21 = vector.broadcast %cst : f32 to vector<1x32x128xf32>
      %22 = arith.select %20, %3, %21 : vector<1x32x128xi1>, vector<1x32x128xf32>
      %cst_8 = arith.constant 0xFF800000 : f32
      %23 = vector.shape_cast %18 : vector<1x1x128xi1> to vector<1x1x128xi1>
      %24 = vector.broadcast %23 : vector<1x1x128xi1> to vector<1x32x128xi1>
      %25 = vector.broadcast %cst_8 : f32 to vector<1x32x128xf32>
      %26 = arith.select %24, %3, %25 : vector<1x32x128xi1>, vector<1x32x128xf32>
      %c0_9 = arith.constant 0 : index
      %c0_10 = arith.constant 0 : index
      %27 = vector.load %arg6[%c0_9, %c0_10] : memref<1x32xf32, #tpu.memory_space<vmem>>, vector<1x32xf32>
      %cst_11 = arith.constant dense<0.000000e+00> : vector<1x32xf32>
      %28 = vector.multi_reduction <add>, %22, %cst_11 [2] : vector<1x32x128xf32> to vector<1x32xf32>
      %29 = arith.addf %27, %28 : vector<1x32xf32>
      %c0_12 = arith.constant 0 : index
      %c0_13 = arith.constant 0 : index
      %30 = vector.load %arg6[%c0_12, %c0_13] : memref<1x32xf32, #tpu.memory_space<vmem>>, vector<1x32xf32>
      tpu.vector_store %arg6[%c0_12, %c0_13], %29 {strides = array<i32>} : memref<1x32xf32, #tpu.memory_space<vmem>>, vector<1x32xf32>,
      %c0_14 = arith.constant 0 : index
      %c0_15 = arith.constant 0 : index
      %31 = vector.load %arg7[%c0_14, %c0_15] : memref<1x32xf32, #tpu.memory_space<vmem>>, vector<1x32xf32>
      %cst_16 = arith.constant dense<0xFF800000> : vector<1x32xf32>
      %32 = vector.multi_reduction <maximumf>, %26, %cst_16 [2] : vector<1x32x128xf32> to vector<1x32xf32>
      %33 = arith.maximumf %31, %32 : vector<1x32xf32>
      %c0_17 = arith.constant 0 : index
      %c0_18 = arith.constant 0 : index
      %34 = vector.load %arg7[%c0_17, %c0_18] : memref<1x32xf32, #tpu.memory_space<vmem>>, vector<1x32xf32>
      tpu.vector_store %arg7[%c0_17, %c0_18], %33 {strides = array<i32>} : memref<1x32xf32, #tpu.memory_space<vmem>>, vector<1x32xf32>,
    } else {
    }
    %c2_i32_6 = arith.constant 2 : i32
    %10 = arith.cmpi eq, %arg1, %c2_i32_6 : i32
    %11 = arith.extui %10 : i1 to i32
    %c0_i32_7 = arith.constant 0 : i32
    %12 = arith.cmpi ne, %11, %c0_i32_7 : i32
    scf.if %12 {
      %c0_8 = arith.constant 0 : index
      %c0_9 = arith.constant 0 : index
      %13 = vector.load %arg6[%c0_8, %c0_9] : memref<1x32xf32, #tpu.memory_space<vmem>>, vector<1x32xf32>
      %cst = arith.constant 0.00347222225 : f32
      %14 = vector.broadcast %cst : f32 to vector<1x32xf32>
      %15 = arith.mulf %13, %14 : vector<1x32xf32>
      %c0_10 = arith.constant 0 : index
      %c0_11 = arith.constant 0 : index
      %16 = vector.load %arg7[%c0_10, %c0_11] : memref<1x32xf32, #tpu.memory_space<vmem>>, vector<1x32xf32>
      %17 = tpu.concatenate %15, %16 in 0 : vector<1x32xf32>, vector<1x32xf32> -> vector<2x32xf32>
      %c0_12 = arith.constant 0 : index
      %c0_13 = arith.constant 0 : index
      %18 = vector.load %arg3[%c0_12, %c0_13] : memref<2x32xf32, #tpu.memory_space<vmem>>, vector<2x32xf32>
      %c0_14 = arith.constant 0 : index
      %c0_15 = arith.constant 0 : index
      %19 = vector.load %arg4[%c0_14, %c0_15] : memref<32x2xf32, #tpu.memory_space<vmem>>, vector<32x2xf32>
      %cst_16 = arith.constant dense<0.000000e+00> : vector<2x2xf32>
      %20 = tpu.matmul %17, %18, %cst_16 {dimension_numbers = #tpu.dot_dimension_numbers<[1], [1], [0], [0], [0, 0, 1, 0], [], []>} : vector<2x32xf32>, vector<2x32xf32>, vector<2x2xf32> -> vector<2x2xf32>
      %cst_17 = arith.constant 0.000000e+00 : f32
      %21 = vector.broadcast %cst_17 : f32 to vector<2x2xf32>
      %22 = arith.maximumf %20, %21 : vector<2x2xf32>
      %cst_18 = arith.constant dense<0.000000e+00> : vector<2x32xf32>
      %23 = tpu.matmul %22, %19, %cst_18 {dimension_numbers = #tpu.dot_dimension_numbers<[1], [1], [0], [0], [0, 0, 1, 0], [], []>} : vector<2x2xf32>, vector<32x2xf32>, vector<2x32xf32> -> vector<2x32xf32>
      %24 = vector.extract_strided_slice %23 {offsets = [0, 0], sizes = [1, 32], strides = [1, 1]} : vector<2x32xf32> to vector<1x32xf32>
      %25 = vector.extract_strided_slice %23 {offsets = [1, 0], sizes = [1, 32], strides = [1, 1]} : vector<2x32xf32> to vector<1x32xf32>
      %26 = arith.addf %24, %25 : vector<1x32xf32>
      %27 = arith.negf %26 : vector<1x32xf32>
      %28 = math.exp %27 : vector<1x32xf32>
      %cst_19 = arith.constant 1.000000e+00 : f32
      %29 = vector.broadcast %cst_19 : f32 to vector<1x32xf32>
      %30 = arith.addf %29, %28 : vector<1x32xf32>
      %31 = arith.divf %29, %30 : vector<1x32xf32>
      %32 = vector.shape_cast %31 : vector<1x32xf32> to vector<1x1x32xf32>
      %c0_20 = arith.constant 0 : index
      %c0_21 = arith.constant 0 : index
      %c0_22 = arith.constant 0 : index
      %33 = vector.load %arg5[%c0_20, %c0_21, %c0_22] : memref<1x1x32xf32, #tpu.memory_space<vmem>>, vector<1x1x32xf32>
      tpu.vector_store %arg5[%c0_20, %c0_21, %c0_22], %32 {strides = array<i32>} : memref<1x1x32xf32, #tpu.memory_space<vmem>>, vector<1x1x32xf32>,
    } else {
    }
    return
  }
  func.func @transform_0(%arg0: i32, %arg1: i32) -> (i32, i32, i32) {
    %c0_i32 = arith.constant 0 : i32
    %c0_i32_0 = arith.constant 0 : i32
    return %arg0, %c0_i32, %arg1 : i32, i32, i32
  }
  func.func @transform_1(%arg0: i32, %arg1: i32) -> (i32, i32) {
    %c0_i32 = arith.constant 0 : i32
    %c0_i32_0 = arith.constant 0 : i32
    %c0_i32_1 = arith.constant 0 : i32
    return %c0_i32, %c0_i32_0 : i32, i32
  }
  func.func @transform_2(%arg0: i32, %arg1: i32) -> (i32, i32) {
    %c0_i32 = arith.constant 0 : i32
    %c0_i32_0 = arith.constant 0 : i32
    %c0_i32_1 = arith.constant 0 : i32
    return %c0_i32, %c0_i32_0 : i32, i32
  }
  func.func @transform_3(%arg0: i32, %arg1: i32) -> (i32, i32, i32) {
    %c0_i32 = arith.constant 0 : i32
    %c0_i32_0 = arith.constant 0 : i32
    %c0_i32_1 = arith.constant 0 : i32
    return %arg0, %c0_i32, %c0_i32_0 : i32, i32, i32
  }
}

</mosaic_0001>

<llo_original>
// kernel: tpu_custom_call.1
$region0: #{tpu_custom_call.1}
  #allocation0 [shape = 'u32[]', space=smem, size = 0x4, offset = 0x4, fixed_abs, tag = 'smem constant byte address 0x4 - core index']
  #allocation1 [shape = 'u32[144,128]{1,0:T(1,128)}', space=vmem, size = 0x12000, scoped, tag = 'internal scratch']
  #allocation2 [shape = 'f32[1,32]{1,0:T(1,128)}', space=vmem, size = 0x200, scoped, tag = 'scratch operand']
  #allocation3 [shape = 'f32[1,32]{1,0:T(1,128)}', space=vmem, size = 0x200, scoped, tag = 'scratch operand']
  %s0 = inlined_call_operand.hbm [shape: f32[2,32,288], index: 0, kind: input, shape index: {}]
  %s1 = inlined_call_operand.vmem [shape: f32[2,32], index: 1, kind: input, shape index: {}]
  %s2 = inlined_call_operand.vmem [shape: f32[32,2], index: 2, kind: input, shape index: {}]
  %s3 = inlined_call_operand.hbm [shape: f32[2,1,32], index: 3, kind: output, shape index: {}]
  %s4 = sld [smem:[#allocation0]]
  $region61: #{tpu_custom_call.1} parent=0
    _
  %s6 = ssub.s32 1, %s4
  %s7 = scalar_select 0, %s6, %s4
  $region1: #{tpu_custom_call.1} parent=0
    #allocation4 [shape = 'u8[32768]{0}', space=vmem, size = 0x8000, scoped, tag = 'input window, operand 0']
    #allocation5 [shape = 's32[2]{0}', space=sflag, size = 0x8, scoped, tag = 'scoped memory for tpu_custom_call.1']
    #allocation6 [shape = 's32[2]{0}', space=sflag, size = 0x8, scoped, tag = 'scoped memory for tpu_custom_call.1']
    #allocation7 [shape = 'u8[1024]{0}', space=vmem, size = 0x400, scoped, tag = 'output window, operand 0']
    %8 = vsyncpa [#allocation5], 0
    %s9 = scalar_lea.sflag [#allocation5], 1
    %10 = vsyncpa %s9, 0
    %11 = vsyncpa [#allocation6], 0
    %s12 = scalar_lea.sflag [#allocation6], 1
    %13 = vsyncpa %s12, 0
    loop: start=0, step=1, limit=8
    $region2: #{tpu_custom_call.1} parent=1 // loop_pre_header
      _
    $region3: #{tpu_custom_call.1} parent=1 // loop_header
      %s15 = sphi 0, %s19
      %p16 = scmp.ge.s32.totalorder %s15, 8
      %s22 = sphi 0, %s34
      %s23 = sphi 0, %s30
      %s24 = sphi 0, %s22
      %s25 = sphi 0, %s23
      %s26 = sphi 0, %s24
      %s27 = sphi 0, %s25
      %s39 = sphi 0, %s41
      %s42 = sphi 0, %s39
      %s43 = sphi 0, %s42
      %s59 = sphi 0, %s43
      %s63 = sphi 0, %s63
      %s65 = sphi 0, %s63
      %s66 = sphi 0, %s65
      %s80 = sphi 0, %s66
      %s84 = sphi 0, %s84
      %s86 = sphi 0, %s84
      %s87 = sphi 0, %s86
      %s101 = sphi 0, %s87
      %s107 = sphi 0, %s109
      %s110 = sphi 0, %s107
      %s111 = sphi 0, %s110
      %s127 = sphi 0, %s111
    $region4: #{tpu_custom_call.1} parent=1 // loop_header_branch
      %18 = sbr.rel (%p16) target = $region8
    $region5: #{tpu_custom_call.1} parent=1 // loop_body
      %s20 = ssub.s32 %s15, 1
      %s21 = ssub.s32 %s15, 2
      %s28 = sadd.s32 1, %s23
      %p29 = scmp.ge.s32.totalorder %s28, 3
      %s30 = scalar_select %p29, 0, %s28
      %s31 = sadd.s32 1, %s22
      %s32 = scalar_select %p29, %s31, %s22
      %p33 = scmp.ge.s32.totalorder %s32, 2
      %s34 = scalar_select %p33, 0, %s32
      %s35 = ssub.s32 %s22, %s34
      %s36 = ssub.s32 %s23, %s30
      %s37 = sor.u32 %s35, %s36
      %p38 = scmp.eq.s32.totalorder %s37, 0
      %s40 = sadd.s32 %s39, 1
      %s41 = scalar_select %p38, %s39, %s40
      %p44 = pneg %p38
      %p45 = scmp.eq.s32.totalorder %s15, 5
      %p46 = por %p44, %p45
      %p47 = scmp.ne.s32.totalorder %s39, %s42
      %p48 = scmp.eq.s32.totalorder %s15, 0
      %p49 = por %p47, %p48
      %p50 = scmp.ne.s32.totalorder %s39, %s42
      %p51 = scmp.eq.s32.totalorder %s20, 5
      %p52 = por %p50, %p51
      %p53 = scmp.ne.s32.totalorder %s42, %s43
      %p54 = scmp.eq.s32.totalorder %s20, 0
      %p55 = por %p53, %p54
      %p56 = scmp.ne.s32.totalorder %s42, %s43
      %p57 = scmp.eq.s32.totalorder %s21, 5
      %p58 = por %p56, %p57
      %p60 = scmp.ne.s32.totalorder %s43, %s59
      %p61 = scmp.eq.s32.totalorder %s21, 0
      %p62 = por %p60, %p61
      %s64 = sadd.s32 %s63, 1
      %p67 = scmp.eq.s32.totalorder %s15, 5
      %p68 = scmp.ne.s32.totalorder %s63, %s65
      %p69 = scmp.eq.s32.totalorder %s15, 0
      %p70 = por %p68, %p69
      %p71 = scmp.ne.s32.totalorder %s63, %s65
      %p72 = scmp.eq.s32.totalorder %s20, 5
      %p73 = por %p71, %p72
      %p74 = scmp.ne.s32.totalorder %s65, %s66
      %p75 = scmp.eq.s32.totalorder %s20, 0
      %p76 = por %p74, %p75
      %p77 = scmp.ne.s32.totalorder %s65, %s66
      %p78 = scmp.eq.s32.totalorder %s21, 5
      %p79 = por %p77, %p78
      %p81 = scmp.ne.s32.totalorder %s66, %s80
      %p82 = scmp.eq.s32.totalorder %s21, 0
      %p83 = por %p81, %p82
      %s85 = sadd.s32 %s84, 1
      %p88 = scmp.eq.s32.totalorder %s15, 5
      %p89 = scmp.ne.s32.totalorder %s84, %s86
      %p90 = scmp.eq.s32.totalorder %s15, 0
      %p91 = por %p89, %p90
      %p92 = scmp.ne.s32.totalorder %s84, %s86
      %p93 = scmp.eq.s32.totalorder %s20, 5
      %p94 = por %p92, %p93
      %p95 = scmp.ne.s32.totalorder %s86, %s87
      %p96 = scmp.eq.s32.totalorder %s20, 0
      %p97 = por %p95, %p96
      %p98 = scmp.ne.s32.totalorder %s86, %s87
      %p99 = scmp.eq.s32.totalorder %s21, 5
      %p100 = por %p98, %p99
      %p102 = scmp.ne.s32.totalorder %s87, %s101
      %p103 = scmp.eq.s32.totalorder %s21, 0
      %p104 = por %p102, %p103
      %s105 = ssub.s32 %s22, %s34
      %p106 = scmp.eq.s32.totalorder %s105, 0
      %s108 = sadd.s32 %s107, 1
      %s109 = scalar_select %p106, %s107, %s108
      %p112 = pneg %p106
      %p113 = scmp.eq.s32.totalorder %s15, 5
      %p114 = por %p112, %p113
      %p115 = scmp.ne.s32.totalorder %s107, %s110
      %p116 = scmp.eq.s32.totalorder %s15, 0
      %p117 = por %p115, %p116
      %p118 = scmp.ne.s32.totalorder %s107, %s110
      %p119 = scmp.eq.s32.totalorder %s20, 5
      %p120 = por %p118, %p119
      %p121 = scmp.ne.s32.totalorder %s110, %s111
      %p122 = scmp.eq.s32.totalorder %s20, 0
      %p123 = por %p121, %p122
      %p124 = scmp.ne.s32.totalorder %s110, %s111
      %p125 = scmp.eq.s32.totalorder %s21, 5
      %p126 = por %p124, %p125
      %p128 = scmp.ne.s32.totalorder %s111, %s127
      %p129 = scmp.eq.s32.totalorder %s21, 0
      %p130 = por %p128, %p129
      %p131 = scmp.le.s32.totalorder 1, %s15
      %p132 = scmp.lt.s32.totalorder %s15, 7
      %p133 = pnand %p131, %p132
      %p134 = pneg %p133
      // Predicated region
      $region9: #{tpu_custom_call.1} parent=5 // pred_check
        _
      $region10: #{tpu_custom_call.1} parent=5 // pred_check_branch
        %136 = sbr.rel (%p133) target = $region12
      $region11: #{tpu_custom_call.1} parent=5 // pred_region
        %s137 = ssub.s32 %s15, 1
        // Predicated region
        $region13: #{tpu_custom_call.1} parent=11 // pred_check
          %p138 = pneg %p76
        $region14: #{tpu_custom_call.1} parent=11 // pred_check_branch
          %140 = sbr.rel (%p138) target = $region16
        $region15: #{tpu_custom_call.1} parent=11 // pred_region
          _
        $region16: #{tpu_custom_call.1} parent=11 // pred_fallthru
          _
        // Predicated region
        $region17: #{tpu_custom_call.1} parent=11 // pred_check
          %p141 = pneg %p97
        $region18: #{tpu_custom_call.1} parent=11 // pred_check_branch
          %143 = sbr.rel (%p141) target = $region20
        $region19: #{tpu_custom_call.1} parent=11 // pred_region
          _
        $region20: #{tpu_custom_call.1} parent=11 // pred_fallthru
          _
      $region12: #{tpu_custom_call.1} parent=5 // pred_fallthru
        _
      %p144 = scmp.lt.s32.totalorder %s15, 6
      // Predicated region
      $region21: #{tpu_custom_call.1} parent=5 // pred_check
        %p145 = pneg %p144
      $region22: #{tpu_custom_call.1} parent=5 // pred_check_branch
        %147 = sbr.rel (%p145) target = $region24
      $region23: #{tpu_custom_call.1} parent=5 // pred_region
        // Predicated region
        $region25: #{tpu_custom_call.1} parent=23 // pred_check
          %p148 = pneg %p49
        $region26: #{tpu_custom_call.1} parent=23 // pred_check_branch
          %150 = sbr.rel (%p148) target = $region28
        $region27: #{tpu_custom_call.1} parent=23 // pred_region
          %s151 = sand.u32 %s39, 1
          %s152 = scalar_lea.sflag [#allocation5], %s151
          %s153 = sand.u32 %s39, 1
          %s154 = smul.addr %s153, 32
          %s155 = scalar_lea.vmem [#allocation4], %s154
          %s157 = ssub.s32 512, 512
          %158 = vsyncadd %s152, %s157
          %s159 = smul.addr %s22, 12
          %s160 = sadd.s32 %s23, %s159
          %s161 = smul.addr %s160, 128
          %s162 = scalar_lea.hbm %s0, %s161
          %s163 = sshll.u32 %s155, 4
          %s164 = int_to_ptr.vmem [resolvable:$true] %s163
          %169 = dma.hbm_to_vmem [thread:$0]  %s162, 512, %s164, %s152, 384, 128, 8
        $region28: #{tpu_custom_call.1} parent=23 // pred_fallthru
          _
      $region24: #{tpu_custom_call.1} parent=5 // pred_fallthru
        _
      %p170 = scmp.le.s32.totalorder 1, %s15
      %p171 = scmp.lt.s32.totalorder %s15, 7
      %p172 = pnand %p170, %p171
      %p173 = pneg %p172
      // Predicated region
      $region29: #{tpu_custom_call.1} parent=5 // pred_check
        _
      $region30: #{tpu_custom_call.1} parent=5 // pred_check_branch
        %175 = sbr.rel (%p172) target = $region32
      $region31: #{tpu_custom_call.1} parent=5 // pred_region
        %s176 = ssub.s32 %s15, 1
        %s177 = sand.u32 %s42, 1
        %s178 = scalar_lea.sflag [#allocation5], %s177
        %s179 = sand.u32 %s42, 1
        %s180 = smul.addr %s179, 32
        %s181 = scalar_lea.vmem [#allocation4], %s180
        // Predicated region
        $region33: #{tpu_custom_call.1} parent=31 // pred_check
          %p182 = pneg %p55
        $region34: #{tpu_custom_call.1} parent=31 // pred_check_branch
          %184 = sbr.rel (%p182) target = $region36
        $region35: #{tpu_custom_call.1} parent=31 // pred_region
          %185 = dma.done %s178, 512
        $region36: #{tpu_custom_call.1} parent=31 // pred_fallthru
          _
        %s186 = sand.u32 %s42, 1
        %s187 = scalar_lea.sflag [#allocation5], %s186
        %s188 = sand.u32 %s42, 1
        %s189 = smul.addr %s188, 32
        %s190 = scalar_lea.vmem [#allocation4], %s189
        %p191 = pneg %p55
        %p192 = pneg %p52
        %p193 = pneg %p76
        %p194 = pneg %p73
        %p195 = pneg %p97
        %p196 = pneg %p94
        %p197 = pneg %p123
        %p198 = pneg %p120
        %s199 = sand.u32 %s110, 1
        %s200 = scalar_lea.sflag [#allocation6], %s199
        %s201 = sand.u32 %s110, 1
        %s202 = scalar_lea.vmem [#allocation7], %s201
        %p203 = scmp.eq.s32.totalorder %s25, 0
        // Predicated region
        $region37: #{tpu_custom_call.1} parent=31 // pred_check
          %p204 = pneg %p203
        $region38: #{tpu_custom_call.1} parent=31 // pred_check_branch
          %206 = sbr.rel (%p204) target = $region40
        $region39: #{tpu_custom_call.1} parent=31 // pred_region
          %vm207 = vcmask 253952
          %208 = vst.msk [vmem:[#allocation2] sm:$0x1] %vm207, 0.0
          %209 = vst.msk [vmem:[#allocation3] sm:$0x1] %vm207, -inf
        $region40: #{tpu_custom_call.1} parent=31 // pred_fallthru
          _
        %v210 = vld [vmem:[%s181] sm:$0xff]
        %v211 = vld [vmem:[%s181 + $0x8] sm:$0xff]
        %v212 = vld [vmem:[%s181 + $0x10] sm:$0xff]
        %v213 = vld [vmem:[%s181 + $0x18] sm:$0xff]
        %p214 = scmp.lt.s32.totalorder %s25, 2
        // Predicated region
        $region41: #{tpu_custom_call.1} parent=31 // pred_check
          %p215 = pneg %p214
        $region42: #{tpu_custom_call.1} parent=31 // pred_check_branch
          %217 = sbr.rel (%p215) target = $region44
        $region43: #{tpu_custom_call.1} parent=31 // pred_region
          %v218 = vld [vmem:[#allocation2] sm:$0x1]
          %219 = vadd.xlane.f32.xlu0 %v210
          %v220 = vpop.xlane.xlu0 %219
          %221 = vadd.xlane.f32.xlu0 %v211
          %v222 = vpop.xlane.xlu0 %221
          %223 = vadd.xlane.f32.xlu0 %v212
          %v224 = vpop.xlane.xlu0 %223
          %225 = vadd.xlane.f32.xlu0 %v213
          %v226 = vpop.xlane.xlu0 %225
          %v231 = vlaneseq
          %v232 = vshrl.u32 %v231, 7
          %v233 = vsub.s32 0, %v232
          %v234 = vrot.slane %v220, %v233
          %v235 = vlaneseq
          %v236 = vshrl.u32 %v235, 7
          %v237 = vsub.s32 1, %v236
          %v238 = vrot.slane %v220, %v237
          %v239 = vlaneseq
          %v240 = vshrl.u32 %v239, 7
          %v241 = vsub.s32 2, %v240
          %v242 = vrot.slane %v220, %v241
          %v243 = vlaneseq
          %v244 = vshrl.u32 %v243, 7
          %v245 = vsub.s32 3, %v244
          %v246 = vrot.slane %v220, %v245
          %v247 = vlaneseq
          %v248 = vshrl.u32 %v247, 7
          %v249 = vsub.s32 4, %v248
          %v250 = vrot.slane %v220, %v249
          %v251 = vlaneseq
          %v252 = vshrl.u32 %v251, 7
          %v253 = vsub.s32 5, %v252
          %v254 = vrot.slane %v220, %v253
          %v255 = vlaneseq
          %v256 = vshrl.u32 %v255, 7
          %v257 = vsub.s32 6, %v256
          %v258 = vrot.slane %v220, %v257
          %v259 = vlaneseq
          %v260 = vshrl.u32 %v259, 7
          %v261 = vsub.s32 7, %v260
          %v262 = vrot.slane %v220, %v261
          %v263 = vlaneseq
          %v264 = vshrl.u32 %v263, 7
          %v265 = vsub.s32 0, %v264
          %v266 = vrot.slane %v222, %v265
          %v267 = vlaneseq
          %v268 = vshrl.u32 %v267, 7
          %v269 = vsub.s32 1, %v268
          %v270 = vrot.slane %v222, %v269
          %v271 = vlaneseq
          %v272 = vshrl.u32 %v271, 7
          %v273 = vsub.s32 2, %v272
          %v274 = vrot.slane %v222, %v273
          %v275 = vlaneseq
          %v276 = vshrl.u32 %v275, 7
          %v277 = vsub.s32 3, %v276
          %v278 = vrot.slane %v222, %v277
          %v279 = vlaneseq
          %v280 = vshrl.u32 %v279, 7
          %v281 = vsub.s32 4, %v280
          %v282 = vrot.slane %v222, %v281
          %v283 = vlaneseq
          %v284 = vshrl.u32 %v283, 7
          %v285 = vsub.s32 5, %v284
          %v286 = vrot.slane %v222, %v285
          %v287 = vlaneseq
          %v288 = vshrl.u32 %v287, 7
          %v289 = vsub.s32 6, %v288
          %v290 = vrot.slane %v222, %v289
          %v291 = vlaneseq
          %v292 = vshrl.u32 %v291, 7
          %v293 = vsub.s32 7, %v292
          %v294 = vrot.slane %v222, %v293
          %v295 = vlaneseq
          %v296 = vshrl.u32 %v295, 7
          %v297 = vsub.s32 0, %v296
          %v298 = vrot.slane %v224, %v297
          %v299 = vlaneseq
          %v300 = vshrl.u32 %v299, 7
          %v301 = vsub.s32 1, %v300
          %v302 = vrot.slane %v224, %v301
          %v303 = vlaneseq
          %v304 = vshrl.u32 %v303, 7
          %v305 = vsub.s32 2, %v304
          %v306 = vrot.slane %v224, %v305
          %v307 = vlaneseq
          %v308 = vshrl.u32 %v307, 7
          %v309 = vsub.s32 3, %v308
          %v310 = vrot.slane %v224, %v309
          %v311 = vlaneseq
          %v312 = vshrl.u32 %v311, 7
          %v313 = vsub.s32 4, %v312
          %v314 = vrot.slane %v224, %v313
          %v315 = vlaneseq
          %v316 = vshrl.u32 %v315, 7
          %v317 = vsub.s32 5, %v316
          %v318 = vrot.slane %v224, %v317
          %v319 = vlaneseq
          %v320 = vshrl.u32 %v319, 7
          %v321 = vsub.s32 6, %v320
          %v322 = vrot.slane %v224, %v321
          %v323 = vlaneseq
          %v324 = vshrl.u32 %v323, 7
          %v325 = vsub.s32 7, %v324
          %v326 = vrot.slane %v224, %v325
          %v327 = vlaneseq
          %v328 = vshrl.u32 %v327, 7
          %v329 = vsub.s32 0, %v328
          %v330 = vrot.slane %v226, %v329
          %v331 = vlaneseq
          %v332 = vshrl.u32 %v331, 7
          %v333 = vsub.s32 1, %v332
          %v334 = vrot.slane %v226, %v333
          %v335 = vlaneseq
          %v336 = vshrl.u32 %v335, 7
          %v337 = vsub.s32 2, %v336
          %v338 = vrot.slane %v226, %v337
          %v339 = vlaneseq
          %v340 = vshrl.u32 %v339, 7
          %v341 = vsub.s32 3, %v340
          %v342 = vrot.slane %v226, %v341
          %v343 = vlaneseq
          %v344 = vshrl.u32 %v343, 7
          %v345 = vsub.s32 4, %v344
          %v346 = vrot.slane %v226, %v345
          %v347 = vlaneseq
          %v348 = vshrl.u32 %v347, 7
          %v349 = vsub.s32 5, %v348
          %v350 = vrot.slane %v226, %v349
          %v351 = vlaneseq
          %v352 = vshrl.u32 %v351, 7
          %v353 = vsub.s32 6, %v352
          %v354 = vrot.slane %v226, %v353
          %v355 = vlaneseq
          %v356 = vshrl.u32 %v355, 7
          %v357 = vsub.s32 7, %v356
          %v358 = vrot.slane %v226, %v357
          %v359 = vcombine.low %v234, %v238
          %v360 = vcombine.low %v242, %v246
          %v361 = vcombine.low %v250, %v254
          %v362 = vcombine.low %v258, %v262
          %v364 = vunpack.c.l.s4 1966171168
          %v365 = vunpack.c.0.s8 %v364
          %v366 = vlaneseq
          %v367 = vshrl.u32 %v366, 7
          %v368 = vsub.s32 %v365, %v367
          %v369 = vrot.slane %v359, %v368
          %v371 = vunpack.c.l.s4 1966171168
          %v372 = vunpack.c.0.s8 %v371
          %v373 = vlaneseq
          %v374 = vshrl.u32 %v373, 7
          %v375 = vsub.s32 %v372, %v374
          %v376 = vrot.slane %v360, %v375
          %v378 = vunpack.c.l.s4 1966171168
          %v379 = vunpack.c.0.s8 %v378
          %v380 = vlaneseq
          %v381 = vshrl.u32 %v380, 7
          %v382 = vsub.s32 %v379, %v381
          %v383 = vrot.slane %v361, %v382
          %v385 = vunpack.c.l.s4 1966171168
          %v386 = vunpack.c.0.s8 %v385
          %v387 = vlaneseq
          %v388 = vshrl.u32 %v387, 7
          %v389 = vsub.s32 %v386, %v388
          %v390 = vrot.slane %v362, %v389
          %v391 = vcombine.low %v369, %v376
          %v392 = vcombine.low %v383, %v390
          %v394 = vunpack.c.l.s4 1966171168
          %v395 = vunpack.c.0.s8 %v394
          %v396 = vlaneseq
          %v397 = vshrl.u32 %v396, 7
          %v398 = vsub.s32 %v395, %v397
          %v399 = vrot.slane %v391, %v398
          %v401 = vunpack.c.l.s4 1966171168
          %v402 = vunpack.c.0.s8 %v401
          %v403 = vlaneseq
          %v404 = vshrl.u32 %v403, 7
          %v405 = vsub.s32 %v402, %v404
          %v406 = vrot.slane %v392, %v405
          %v407 = vcombine.low %v399, %v406
          %v408 = vcombine.low %v266, %v270
          %v409 = vcombine.low %v274, %v278
          %v410 = vcombine.low %v282, %v286
          %v411 = vcombine.low %v290, %v294
          %v413 = vunpack.c.l.s4 1966171168
          %v414 = vunpack.c.0.s8 %v413
          %v415 = vlaneseq
          %v416 = vshrl.u32 %v415, 7
          %v417 = vsub.s32 %v414, %v416
          %v418 = vrot.slane %v408, %v417
          %v420 = vunpack.c.l.s4 1966171168
          %v421 = vunpack.c.0.s8 %v420
          %v422 = vlaneseq
          %v423 = vshrl.u32 %v422, 7
          %v424 = vsub.s32 %v421, %v423
          %v425 = vrot.slane %v409, %v424
          %v427 = vunpack.c.l.s4 1966171168
          %v428 = vunpack.c.0.s8 %v427
          %v429 = vlaneseq
          %v430 = vshrl.u32 %v429, 7
          %v431 = vsub.s32 %v428, %v430
          %v432 = vrot.slane %v410, %v431
          %v434 = vunpack.c.l.s4 1966171168
          %v435 = vunpack.c.0.s8 %v434
          %v436 = vlaneseq
          %v437 = vshrl.u32 %v436, 7
          %v438 = vsub.s32 %v435, %v437
          %v439 = vrot.slane %v411, %v438
          %v440 = vcombine.low %v418, %v425
          %v441 = vcombine.low %v432, %v439
          %v443 = vunpack.c.l.s4 1966171168
          %v444 = vunpack.c.0.s8 %v443
          %v445 = vlaneseq
          %v446 = vshrl.u32 %v445, 7
          %v447 = vsub.s32 %v444, %v446
          %v448 = vrot.slane %v440, %v447
          %v450 = vunpack.c.l.s4 1966171168
          %v451 = vunpack.c.0.s8 %v450
          %v452 = vlaneseq
          %v453 = vshrl.u32 %v452, 7
          %v454 = vsub.s32 %v451, %v453
          %v455 = vrot.slane %v441, %v454
          %v456 = vcombine.low %v448, %v455
          %v457 = vcombine.low %v298, %v302
          %v458 = vcombine.low %v306, %v310
          %v459 = vcombine.low %v314, %v318
          %v460 = vcombine.low %v322, %v326
          %v462 = vunpack.c.l.s4 1966171168
          %v463 = vunpack.c.0.s8 %v462
          %v464 = vlaneseq
          %v465 = vshrl.u32 %v464, 7
          %v466 = vsub.s32 %v463, %v465
          %v467 = vrot.slane %v457, %v466
          %v469 = vunpack.c.l.s4 1966171168
          %v470 = vunpack.c.0.s8 %v469
          %v471 = vlaneseq
          %v472 = vshrl.u32 %v471, 7
          %v473 = vsub.s32 %v470, %v472
          %v474 = vrot.slane %v458, %v473
          %v476 = vunpack.c.l.s4 1966171168
          %v477 = vunpack.c.0.s8 %v476
          %v478 = vlaneseq
          %v479 = vshrl.u32 %v478, 7
          %v480 = vsub.s32 %v477, %v479
          %v481 = vrot.slane %v459, %v480
          %v483 = vunpack.c.l.s4 1966171168
          %v484 = vunpack.c.0.s8 %v483
          %v485 = vlaneseq
          %v486 = vshrl.u32 %v485, 7
          %v487 = vsub.s32 %v484, %v486
          %v488 = vrot.slane %v460, %v487
          %v489 = vcombine.low %v467, %v474
          %v490 = vcombine.low %v481, %v488
          %v492 = vunpack.c.l.s4 1966171168
          %v493 = vunpack.c.0.s8 %v492
          %v494 = vlaneseq
          %v495 = vshrl.u32 %v494, 7
          %v496 = vsub.s32 %v493, %v495
          %v497 = vrot.slane %v489, %v496
          %v499 = vunpack.c.l.s4 1966171168
          %v500 = vunpack.c.0.s8 %v499
          %v501 = vlaneseq
          %v502 = vshrl.u32 %v501, 7
          %v503 = vsub.s32 %v500, %v502
          %v504 = vrot.slane %v490, %v503
          %v505 = vcombine.low %v497, %v504
          %v506 = vcombine.low %v330, %v334
          %v507 = vcombine.low %v338, %v342
          %v508 = vcombine.low %v346, %v350
          %v509 = vcombine.low %v354, %v358
          %v511 = vunpack.c.l.s4 1966171168
          %v512 = vunpack.c.0.s8 %v511
          %v513 = vlaneseq
          %v514 = vshrl.u32 %v513, 7
          %v515 = vsub.s32 %v512, %v514
          %v516 = vrot.slane %v506, %v515
          %v518 = vunpack.c.l.s4 1966171168
          %v519 = vunpack.c.0.s8 %v518
          %v520 = vlaneseq
          %v521 = vshrl.u32 %v520, 7
          %v522 = vsub.s32 %v519, %v521
          %v523 = vrot.slane %v507, %v522
          %v525 = vunpack.c.l.s4 1966171168
          %v526 = vunpack.c.0.s8 %v525
          %v527 = vlaneseq
          %v528 = vshrl.u32 %v527, 7
          %v529 = vsub.s32 %v526, %v528
          %v530 = vrot.slane %v508, %v529
          %v532 = vunpack.c.l.s4 1966171168
          %v533 = vunpack.c.0.s8 %v532
          %v534 = vlaneseq
          %v535 = vshrl.u32 %v534, 7
          %v536 = vsub.s32 %v533, %v535
          %v537 = vrot.slane %v509, %v536
          %v538 = vcombine.low %v516, %v523
          %v539 = vcombine.low %v530, %v537
          %v541 = vunpack.c.l.s4 1966171168
          %v542 = vunpack.c.0.s8 %v541
          %v543 = vlaneseq
          %v544 = vshrl.u32 %v543, 7
          %v545 = vsub.s32 %v542, %v544
          %v546 = vrot.slane %v538, %v545
          %v548 = vunpack.c.l.s4 1966171168
          %v549 = vunpack.c.0.s8 %v548
          %v550 = vlaneseq
          %v551 = vshrl.u32 %v550, 7
          %v552 = vsub.s32 %v549, %v551
          %v553 = vrot.slane %v539, %v552
          %v554 = vcombine.low %v546, %v553
          %555 = vset.pattern.permute.xlu0 0
          %556 = vperm.xlu0 %555, %v407
          %v557 = vpop.permute.xlu0 %556
          %558 = vset.pattern.permute.xlu0 0
          %559 = vperm.xlu0 %558, %v456
          %v560 = vpop.permute.xlu0 %559
          %561 = vset.pattern.permute.xlu0 0
          %562 = vperm.xlu0 %561, %v505
          %v563 = vpop.permute.xlu0 %562
          %564 = vset.pattern.permute.xlu0 0
          %565 = vperm.xlu0 %564, %v554
          %v566 = vpop.permute.xlu0 %565
          %v567 = vlaneseq
          %v568 = vand.u32 %v567, 127
          %v569 = vlaneseq
          %v570 = vshrl.u32 %v569, 7
          %v571 = vsub.s32 %v568, %v570
          %v572 = vrot.slane %v557, %v571
          %v573 = vadd.s32 %v568, 4294967288
          %v574 = vlaneseq
          %v575 = vshrl.u32 %v574, 7
          %v576 = vsub.s32 %v573, %v575
          %v577 = vrot.slane %v560, %v576
          %vm578 = vcmask 130112
          %v579 = vsel %vm578, %v577, %v572
          %v580 = vadd.s32 %v568, 4294967280
          %v581 = vlaneseq
          %v582 = vshrl.u32 %v581, 7
          %v583 = vsub.s32 %v580, %v582
          %v584 = vrot.slane %v563, %v583
          %vm585 = vcmask 195712
          %v586 = vsel %vm585, %v584, %v579
          %v587 = vadd.s32 %v568, 4294967272
          %v588 = vlaneseq
          %v589 = vshrl.u32 %v588, 7
          %v590 = vsub.s32 %v587, %v589
          %v591 = vrot.slane %v566, %v590
          %vm592 = vcmask 261312
          %v593 = vsel %vm592, %v591, %v586
          %v595 = vunpack.c.l.s4 1966171168
          %v596 = vunpack.c.0.s8 %v595
          %v597 = vlaneseq
          %v598 = vshrl.u32 %v597, 7
          %v599 = vsub.s32 %v596, %v598
          %v600 = vrot.slane %v593, %v599
          %v602 = vunpack.c.l.s4 1966171168
          %v603 = vunpack.c.0.s8 %v602
          %v604 = vlaneseq
          %v605 = vshrl.u32 %v604, 7
          %v606 = vsub.s32 %v603, %v605
          %v607 = vrot.slane %v600, %v606
          %v609 = vadd.f32 %v218, %v607
          %vm610 = vcmask 253952
          %611 = vst.msk [vmem:[#allocation2] sm:$0x1] %vm610, %v609
          %v612 = vld [vmem:[#allocation3] sm:$0x1]
          %613 = vmax.xlane.f32.xlu0 %v210
          %v614 = vpop.xlane.xlu0 %613
          %615 = vmax.xlane.f32.xlu0 %v211
          %v616 = vpop.xlane.xlu0 %615
          %617 = vmax.xlane.f32.xlu0 %v212
          %v618 = vpop.xlane.xlu0 %617
          %619 = vmax.xlane.f32.xlu0 %v213
          %v620 = vpop.xlane.xlu0 %619
          %v625 = vlaneseq
          %v626 = vshrl.u32 %v625, 7
          %v627 = vsub.s32 0, %v626
          %v628 = vrot.slane %v614, %v627
          %v629 = vlaneseq
          %v630 = vshrl.u32 %v629, 7
          %v631 = vsub.s32 1, %v630
          %v632 = vrot.slane %v614, %v631
          %v633 = vlaneseq
          %v634 = vshrl.u32 %v633, 7
          %v635 = vsub.s32 2, %v634
          %v636 = vrot.slane %v614, %v635
          %v637 = vlaneseq
          %v638 = vshrl.u32 %v637, 7
          %v639 = vsub.s32 3, %v638
          %v640 = vrot.slane %v614, %v639
          %v641 = vlaneseq
          %v642 = vshrl.u32 %v641, 7
          %v643 = vsub.s32 4, %v642
          %v644 = vrot.slane %v614, %v643
          %v645 = vlaneseq
          %v646 = vshrl.u32 %v645, 7
          %v647 = vsub.s32 5, %v646
          %v648 = vrot.slane %v614, %v647
          %v649 = vlaneseq
          %v650 = vshrl.u32 %v649, 7
          %v651 = vsub.s32 6, %v650
          %v652 = vrot.slane %v614, %v651
          %v653 = vlaneseq
          %v654 = vshrl.u32 %v653, 7
          %v655 = vsub.s32 7, %v654
          %v656 = vrot.slane %v614, %v655
          %v657 = vlaneseq
          %v658 = vshrl.u32 %v657, 7
          %v659 = vsub.s32 0, %v658
          %v660 = vrot.slane %v616, %v659
          %v661 = vlaneseq
          %v662 = vshrl.u32 %v661, 7
          %v663 = vsub.s32 1, %v662
          %v664 = vrot.slane %v616, %v663
          %v665 = vlaneseq
          %v666 = vshrl.u32 %v665, 7
          %v667 = vsub.s32 2, %v666
          %v668 = vrot.slane %v616, %v667
          %v669 = vlaneseq
          %v670 = vshrl.u32 %v669, 7
          %v671 = vsub.s32 3, %v670
          %v672 = vrot.slane %v616, %v671
          %v673 = vlaneseq
          %v674 = vshrl.u32 %v673, 7
          %v675 = vsub.s32 4, %v674
          %v676 = vrot.slane %v616, %v675
          %v677 = vlaneseq
          %v678 = vshrl.u32 %v677, 7
          %v679 = vsub.s32 5, %v678
          %v680 = vrot.slane %v616, %v679
          %v681 = vlaneseq
          %v682 = vshrl.u32 %v681, 7
          %v683 = vsub.s32 6, %v682
          %v684 = vrot.slane %v616, %v683
          %v685 = vlaneseq
          %v686 = vshrl.u32 %v685, 7
          %v687 = vsub.s32 7, %v686
          %v688 = vrot.slane %v616, %v687
          %v689 = vlaneseq
          %v690 = vshrl.u32 %v689, 7
          %v691 = vsub.s32 0, %v690
          %v692 = vrot.slane %v618, %v691
          %v693 = vlaneseq
          %v694 = vshrl.u32 %v693, 7
          %v695 = vsub.s32 1, %v694
          %v696 = vrot.slane %v618, %v695
          %v697 = vlaneseq
          %v698 = vshrl.u32 %v697, 7
          %v699 = vsub.s32 2, %v698
          %v700 = vrot.slane %v618, %v699
          %v701 = vlaneseq
          %v702 = vshrl.u32 %v701, 7
          %v703 = vsub.s32 3, %v702
          %v704 = vrot.slane %v618, %v703
          %v705 = vlaneseq
          %v706 = vshrl.u32 %v705, 7
          %v707 = vsub.s32 4, %v706
          %v708 = vrot.slane %v618, %v707
          %v709 = vlaneseq
          %v710 = vshrl.u32 %v709, 7
          %v711 = vsub.s32 5, %v710
          %v712 = vrot.slane %v618, %v711
          %v713 = vlaneseq
          %v714 = vshrl.u32 %v713, 7
          %v715 = vsub.s32 6, %v714
          %v716 = vrot.slane %v618, %v715
          %v717 = vlaneseq
          %v718 = vshrl.u32 %v717, 7
          %v719 = vsub.s32 7, %v718
          %v720 = vrot.slane %v618, %v719
          %v721 = vlaneseq
          %v722 = vshrl.u32 %v721, 7
          %v723 = vsub.s32 0, %v722
          %v724 = vrot.slane %v620, %v723
          %v725 = vlaneseq
          %v726 = vshrl.u32 %v725, 7
          %v727 = vsub.s32 1, %v726
          %v728 = vrot.slane %v620, %v727
          %v729 = vlaneseq
          %v730 = vshrl.u32 %v729, 7
          %v731 = vsub.s32 2, %v730
          %v732 = vrot.slane %v620, %v731
          %v733 = vlaneseq
          %v734 = vshrl.u32 %v733, 7
          %v735 = vsub.s32 3, %v734
          %v736 = vrot.slane %v620, %v735
          %v737 = vlaneseq
          %v738 = vshrl.u32 %v737, 7
          %v739 = vsub.s32 4, %v738
          %v740 = vrot.slane %v620, %v739
          %v741 = vlaneseq
          %v742 = vshrl.u32 %v741, 7
          %v743 = vsub.s32 5, %v742
          %v744 = vrot.slane %v620, %v743
          %v745 = vlaneseq
          %v746 = vshrl.u32 %v745, 7
          %v747 = vsub.s32 6, %v746
          %v748 = vrot.slane %v620, %v747
          %v749 = vlaneseq
          %v750 = vshrl.u32 %v749, 7
          %v751 = vsub.s32 7, %v750
          %v752 = vrot.slane %v620, %v751
          %v753 = vcombine.low %v628, %v632
          %v754 = vcombine.low %v636, %v640
          %v755 = vcombine.low %v644, %v648
          %v756 = vcombine.low %v652, %v656
          %v758 = vunpack.c.l.s4 1966171168
          %v759 = vunpack.c.0.s8 %v758
          %v760 = vlaneseq
          %v761 = vshrl.u32 %v760, 7
          %v762 = vsub.s32 %v759, %v761
          %v763 = vrot.slane %v753, %v762
          %v765 = vunpack.c.l.s4 1966171168
          %v766 = vunpack.c.0.s8 %v765
          %v767 = vlaneseq
          %v768 = vshrl.u32 %v767, 7
          %v769 = vsub.s32 %v766, %v768
          %v770 = vrot.slane %v754, %v769
          %v772 = vunpack.c.l.s4 1966171168
          %v773 = vunpack.c.0.s8 %v772
          %v774 = vlaneseq
          %v775 = vshrl.u32 %v774, 7
          %v776 = vsub.s32 %v773, %v775
          %v777 = vrot.slane %v755, %v776
          %v779 = vunpack.c.l.s4 1966171168
          %v780 = vunpack.c.0.s8 %v779
          %v781 = vlaneseq
          %v782 = vshrl.u32 %v781, 7
          %v783 = vsub.s32 %v780, %v782
          %v784 = vrot.slane %v756, %v783
          %v785 = vcombine.low %v763, %v770
          %v786 = vcombine.low %v777, %v784
          %v788 = vunpack.c.l.s4 1966171168
          %v789 = vunpack.c.0.s8 %v788
          %v790 = vlaneseq
          %v791 = vshrl.u32 %v790, 7
          %v792 = vsub.s32 %v789, %v791
          %v793 = vrot.slane %v785, %v792
          %v795 = vunpack.c.l.s4 1966171168
          %v796 = vunpack.c.0.s8 %v795
          %v797 = vlaneseq
          %v798 = vshrl.u32 %v797, 7
          %v799 = vsub.s32 %v796, %v798
          %v800 = vrot.slane %v786, %v799
          %v801 = vcombine.low %v793, %v800
          %v802 = vcombine.low %v660, %v664
          %v803 = vcombine.low %v668, %v672
          %v804 = vcombine.low %v676, %v680
          %v805 = vcombine.low %v684, %v688
          %v807 = vunpack.c.l.s4 1966171168
          %v808 = vunpack.c.0.s8 %v807
          %v809 = vlaneseq
          %v810 = vshrl.u32 %v809, 7
          %v811 = vsub.s32 %v808, %v810
          %v812 = vrot.slane %v802, %v811
          %v814 = vunpack.c.l.s4 1966171168
          %v815 = vunpack.c.0.s8 %v814
          %v816 = vlaneseq
          %v817 = vshrl.u32 %v816, 7
          %v818 = vsub.s32 %v815, %v817
          %v819 = vrot.slane %v803, %v818
          %v821 = vunpack.c.l.s4 1966171168
          %v822 = vunpack.c.0.s8 %v821
          %v823 = vlaneseq
          %v824 = vshrl.u32 %v823, 7
          %v825 = vsub.s32 %v822, %v824
          %v826 = vrot.slane %v804, %v825
          %v828 = vunpack.c.l.s4 1966171168
          %v829 = vunpack.c.0.s8 %v828
          %v830 = vlaneseq
          %v831 = vshrl.u32 %v830, 7
          %v832 = vsub.s32 %v829, %v831
          %v833 = vrot.slane %v805, %v832
          %v834 = vcombine.low %v812, %v819
          %v835 = vcombine.low %v826, %v833
          %v837 = vunpack.c.l.s4 1966171168
          %v838 = vunpack.c.0.s8 %v837
          %v839 = vlaneseq
          %v840 = vshrl.u32 %v839, 7
          %v841 = vsub.s32 %v838, %v840
          %v842 = vrot.slane %v834, %v841
          %v844 = vunpack.c.l.s4 1966171168
          %v845 = vunpack.c.0.s8 %v844
          %v846 = vlaneseq
          %v847 = vshrl.u32 %v846, 7
          %v848 = vsub.s32 %v845, %v847
          %v849 = vrot.slane %v835, %v848
          %v850 = vcombine.low %v842, %v849
          %v851 = vcombine.low %v692, %v696
          %v852 = vcombine.low %v700, %v704
          %v853 = vcombine.low %v708, %v712
          %v854 = vcombine.low %v716, %v720
          %v856 = vunpack.c.l.s4 1966171168
          %v857 = vunpack.c.0.s8 %v856
          %v858 = vlaneseq
          %v859 = vshrl.u32 %v858, 7
          %v860 = vsub.s32 %v857, %v859
          %v861 = vrot.slane %v851, %v860
          %v863 = vunpack.c.l.s4 1966171168
          %v864 = vunpack.c.0.s8 %v863
          %v865 = vlaneseq
          %v866 = vshrl.u32 %v865, 7
          %v867 = vsub.s32 %v864, %v866
          %v868 = vrot.slane %v852, %v867
          %v870 = vunpack.c.l.s4 1966171168
          %v871 = vunpack.c.0.s8 %v870
          %v872 = vlaneseq
          %v873 = vshrl.u32 %v872, 7
          %v874 = vsub.s32 %v871, %v873
          %v875 = vrot.slane %v853, %v874
          %v877 = vunpack.c.l.s4 1966171168
          %v878 = vunpack.c.0.s8 %v877
          %v879 = vlaneseq
          %v880 = vshrl.u32 %v879, 7
          %v881 = vsub.s32 %v878, %v880
          %v882 = vrot.slane %v854, %v881
          %v883 = vcombine.low %v861, %v868
          %v884 = vcombine.low %v875, %v882
          %v886 = vunpack.c.l.s4 1966171168
          %v887 = vunpack.c.0.s8 %v886
          %v888 = vlaneseq
          %v889 = vshrl.u32 %v888, 7
          %v890 = vsub.s32 %v887, %v889
          %v891 = vrot.slane %v883, %v890
          %v893 = vunpack.c.l.s4 1966171168
          %v894 = vunpack.c.0.s8 %v893
          %v895 = vlaneseq
          %v896 = vshrl.u32 %v895, 7
          %v897 = vsub.s32 %v894, %v896
          %v898 = vrot.slane %v884, %v897
          %v899 = vcombine.low %v891, %v898
          %v900 = vcombine.low %v724, %v728
          %v901 = vcombine.low %v732, %v736
          %v902 = vcombine.low %v740, %v744
          %v903 = vcombine.low %v748, %v752
          %v905 = vunpack.c.l.s4 1966171168
          %v906 = vunpack.c.0.s8 %v905
          %v907 = vlaneseq
          %v908 = vshrl.u32 %v907, 7
          %v909 = vsub.s32 %v906, %v908
          %v910 = vrot.slane %v900, %v909
          %v912 = vunpack.c.l.s4 1966171168
          %v913 = vunpack.c.0.s8 %v912
          %v914 = vlaneseq
          %v915 = vshrl.u32 %v914, 7
          %v916 = vsub.s32 %v913, %v915
          %v917 = vrot.slane %v901, %v916
          %v919 = vunpack.c.l.s4 1966171168
          %v920 = vunpack.c.0.s8 %v919
          %v921 = vlaneseq
          %v922 = vshrl.u32 %v921, 7
          %v923 = vsub.s32 %v920, %v922
          %v924 = vrot.slane %v902, %v923
          %v926 = vunpack.c.l.s4 1966171168
          %v927 = vunpack.c.0.s8 %v926
          %v928 = vlaneseq
          %v929 = vshrl.u32 %v928, 7
          %v930 = vsub.s32 %v927, %v929
          %v931 = vrot.slane %v903, %v930
          %v932 = vcombine.low %v910, %v917
          %v933 = vcombine.low %v924, %v931
          %v935 = vunpack.c.l.s4 1966171168
          %v936 = vunpack.c.0.s8 %v935
          %v937 = vlaneseq
          %v938 = vshrl.u32 %v937, 7
          %v939 = vsub.s32 %v936, %v938
          %v940 = vrot.slane %v932, %v939
          %v942 = vunpack.c.l.s4 1966171168
          %v943 = vunpack.c.0.s8 %v942
          %v944 = vlaneseq
          %v945 = vshrl.u32 %v944, 7
          %v946 = vsub.s32 %v943, %v945
          %v947 = vrot.slane %v933, %v946
          %v948 = vcombine.low %v940, %v947
          %949 = vset.pattern.permute.xlu0 0
          %950 = vperm.xlu0 %949, %v801
          %v951 = vpop.permute.xlu0 %950
          %952 = vset.pattern.permute.xlu0 0
          %953 = vperm.xlu0 %952, %v850
          %v954 = vpop.permute.xlu0 %953
          %955 = vset.pattern.permute.xlu0 0
          %956 = vperm.xlu0 %955, %v899
          %v957 = vpop.permute.xlu0 %956
          %958 = vset.pattern.permute.xlu0 0
          %959 = vperm.xlu0 %958, %v948
          %v960 = vpop.permute.xlu0 %959
          %v961 = vlaneseq
          %v962 = vshrl.u32 %v961, 7
          %v963 = vsub.s32 %v568, %v962
          %v964 = vrot.slane %v951, %v963
          %v965 = vlaneseq
          %v966 = vshrl.u32 %v965, 7
          %v967 = vsub.s32 %v573, %v966
          %v968 = vrot.slane %v954, %v967
          %v969 = vsel %vm578, %v968, %v964
          %v970 = vlaneseq
          %v971 = vshrl.u32 %v970, 7
          %v972 = vsub.s32 %v580, %v971
          %v973 = vrot.slane %v957, %v972
          %v974 = vsel %vm585, %v973, %v969
          %v975 = vlaneseq
          %v976 = vshrl.u32 %v975, 7
          %v977 = vsub.s32 %v587, %v976
          %v978 = vrot.slane %v960, %v977
          %v979 = vsel %vm592, %v978, %v974
          %v981 = vunpack.c.l.s4 1966171168
          %v982 = vunpack.c.0.s8 %v981
          %v983 = vlaneseq
          %v984 = vshrl.u32 %v983, 7
          %v985 = vsub.s32 %v982, %v984
          %v986 = vrot.slane %v979, %v985
          %v988 = vunpack.c.l.s4 1966171168
          %v989 = vunpack.c.0.s8 %v988
          %v990 = vlaneseq
          %v991 = vshrl.u32 %v990, 7
          %v992 = vsub.s32 %v989, %v991
          %v993 = vrot.slane %v986, %v992
          %v995 = vmax.f32 %v612, %v993
          %996 = vst.msk [vmem:[#allocation3] sm:$0x1] %vm610, %v995
        $region44: #{tpu_custom_call.1} parent=31 // pred_fallthru
          _
        %p997 = scmp.eq.s32.totalorder %s25, 2
        // Predicated region
        $region45: #{tpu_custom_call.1} parent=31 // pred_check
          %p998 = pneg %p997
        $region46: #{tpu_custom_call.1} parent=31 // pred_check_branch
          %1000 = sbr.rel (%p998) target = $region48
        $region47: #{tpu_custom_call.1} parent=31 // pred_region
          %s1001 = smul.u32 %s25, 128
          %v1002 = vlaneseq
          %v1003 = vand.u32 %v1002, 127
          %v1004 = vstv %s1001
          %v1005 = vadd.s32 %v1004, %v1003
          %vm1006 = vcmp.lt.s32.totalorder %v1005, 288
          %v1007 = vsel %vm1006, 1, 0
          %vm1008 = vcmp.eq.s32.totalorder %v1007, 1
          %v1009 = vsel %vm1008, %v210, 0.0
          %v1010 = vsel %vm1008, %v211, 0.0
          %v1011 = vsel %vm1008, %v212, 0.0
          %v1012 = vsel %vm1008, %v213, 0.0
          %v1013 = vsel %vm1008, %v210, -inf
          %v1014 = vsel %vm1008, %v211, -inf
          %v1015 = vsel %vm1008, %v212, -inf
          %v1016 = vsel %vm1008, %v213, -inf
          %v1017 = vld [vmem:[#allocation2] sm:$0x1]
          %1018 = vadd.xlane.f32.xlu0 %v1009
          %v1019 = vpop.xlane.xlu0 %1018
          %1020 = vadd.xlane.f32.xlu0 %v1010
          %v1021 = vpop.xlane.xlu0 %1020
          %1022 = vadd.xlane.f32.xlu0 %v1011
          %v1023 = vpop.xlane.xlu0 %1022
          %1024 = vadd.xlane.f32.xlu0 %v1012
          %v1025 = vpop.xlane.xlu0 %1024
          %v1030 = vlaneseq
          %v1031 = vshrl.u32 %v1030, 7
          %v1032 = vsub.s32 0, %v1031
          %v1033 = vrot.slane %v1019, %v1032
          %v1034 = vlaneseq
          %v1035 = vshrl.u32 %v1034, 7
          %v1036 = vsub.s32 1, %v1035
          %v1037 = vrot.slane %v1019, %v1036
          %v1038 = vlaneseq
          %v1039 = vshrl.u32 %v1038, 7
          %v1040 = vsub.s32 2, %v1039
          %v1041 = vrot.slane %v1019, %v1040
          %v1042 = vlaneseq
          %v1043 = vshrl.u32 %v1042, 7
          %v1044 = vsub.s32 3, %v1043
          %v1045 = vrot.slane %v1019, %v1044
          %v1046 = vlaneseq
          %v1047 = vshrl.u32 %v1046, 7
          %v1048 = vsub.s32 4, %v1047
          %v1049 = vrot.slane %v1019, %v1048
          %v1050 = vlaneseq
          %v1051 = vshrl.u32 %v1050, 7
          %v1052 = vsub.s32 5, %v1051
          %v1053 = vrot.slane %v1019, %v1052
          %v1054 = vlaneseq
          %v1055 = vshrl.u32 %v1054, 7
          %v1056 = vsub.s32 6, %v1055
          %v1057 = vrot.slane %v1019, %v1056
          %v1058 = vlaneseq
          %v1059 = vshrl.u32 %v1058, 7
          %v1060 = vsub.s32 7, %v1059
          %v1061 = vrot.slane %v1019, %v1060
          %v1062 = vlaneseq
          %v1063 = vshrl.u32 %v1062, 7
          %v1064 = vsub.s32 0, %v1063
          %v1065 = vrot.slane %v1021, %v1064
          %v1066 = vlaneseq
          %v1067 = vshrl.u32 %v1066, 7
          %v1068 = vsub.s32 1, %v1067
          %v1069 = vrot.slane %v1021, %v1068
          %v1070 = vlaneseq
          %v1071 = vshrl.u32 %v1070, 7
          %v1072 = vsub.s32 2, %v1071
          %v1073 = vrot.slane %v1021, %v1072
          %v1074 = vlaneseq
          %v1075 = vshrl.u32 %v1074, 7
          %v1076 = vsub.s32 3, %v1075
          %v1077 = vrot.slane %v1021, %v1076
          %v1078 = vlaneseq
          %v1079 = vshrl.u32 %v1078, 7
          %v1080 = vsub.s32 4, %v1079
          %v1081 = vrot.slane %v1021, %v1080
          %v1082 = vlaneseq
          %v1083 = vshrl.u32 %v1082, 7
          %v1084 = vsub.s32 5, %v1083
          %v1085 = vrot.slane %v1021, %v1084
          %v1086 = vlaneseq
          %v1087 = vshrl.u32 %v1086, 7
          %v1088 = vsub.s32 6, %v1087
          %v1089 = vrot.slane %v1021, %v1088
          %v1090 = vlaneseq
          %v1091 = vshrl.u32 %v1090, 7
          %v1092 = vsub.s32 7, %v1091
          %v1093 = vrot.slane %v1021, %v1092
          %v1094 = vlaneseq
          %v1095 = vshrl.u32 %v1094, 7
          %v1096 = vsub.s32 0, %v1095
          %v1097 = vrot.slane %v1023, %v1096
          %v1098 = vlaneseq
          %v1099 = vshrl.u32 %v1098, 7
          %v1100 = vsub.s32 1, %v1099
          %v1101 = vrot.slane %v1023, %v1100
          %v1102 = vlaneseq
          %v1103 = vshrl.u32 %v1102, 7
          %v1104 = vsub.s32 2, %v1103
          %v1105 = vrot.slane %v1023, %v1104
          %v1106 = vlaneseq
          %v1107 = vshrl.u32 %v1106, 7
          %v1108 = vsub.s32 3, %v1107
          %v1109 = vrot.slane %v1023, %v1108
          %v1110 = vlaneseq
          %v1111 = vshrl.u32 %v1110, 7
          %v1112 = vsub.s32 4, %v1111
          %v1113 = vrot.slane %v1023, %v1112
          %v1114 = vlaneseq
          %v1115 = vshrl.u32 %v1114, 7
          %v1116 = vsub.s32 5, %v1115
          %v1117 = vrot.slane %v1023, %v1116
          %v1118 = vlaneseq
          %v1119 = vshrl.u32 %v1118, 7
          %v1120 = vsub.s32 6, %v1119
          %v1121 = vrot.slane %v1023, %v1120
          %v1122 = vlaneseq
          %v1123 = vshrl.u32 %v1122, 7
          %v1124 = vsub.s32 7, %v1123
          %v1125 = vrot.slane %v1023, %v1124
          %v1126 = vlaneseq
          %v1127 = vshrl.u32 %v1126, 7
          %v1128 = vsub.s32 0, %v1127
          %v1129 = vrot.slane %v1025, %v1128
          %v1130 = vlaneseq
          %v1131 = vshrl.u32 %v1130, 7
          %v1132 = vsub.s32 1, %v1131
          %v1133 = vrot.slane %v1025, %v1132
          %v1134 = vlaneseq
          %v1135 = vshrl.u32 %v1134, 7
          %v1136 = vsub.s32 2, %v1135
          %v1137 = vrot.slane %v1025, %v1136
          %v1138 = vlaneseq
          %v1139 = vshrl.u32 %v1138, 7
          %v1140 = vsub.s32 3, %v1139
          %v1141 = vrot.slane %v1025, %v1140
          %v1142 = vlaneseq
          %v1143 = vshrl.u32 %v1142, 7
          %v1144 = vsub.s32 4, %v1143
          %v1145 = vrot.slane %v1025, %v1144
          %v1146 = vlaneseq
          %v1147 = vshrl.u32 %v1146, 7
          %v1148 = vsub.s32 5, %v1147
          %v1149 = vrot.slane %v1025, %v1148
          %v1150 = vlaneseq
          %v1151 = vshrl.u32 %v1150, 7
          %v1152 = vsub.s32 6, %v1151
          %v1153 = vrot.slane %v1025, %v1152
          %v1154 = vlaneseq
          %v1155 = vshrl.u32 %v1154, 7
          %v1156 = vsub.s32 7, %v1155
          %v1157 = vrot.slane %v1025, %v1156
          %v1158 = vcombine.low %v1033, %v1037
          %v1159 = vcombine.low %v1041, %v1045
          %v1160 = vcombine.low %v1049, %v1053
          %v1161 = vcombine.low %v1057, %v1061
          %v1163 = vunpack.c.l.s4 1966171168
          %v1164 = vunpack.c.0.s8 %v1163
          %v1165 = vlaneseq
          %v1166 = vshrl.u32 %v1165, 7
          %v1167 = vsub.s32 %v1164, %v1166
          %v1168 = vrot.slane %v1158, %v1167
          %v1170 = vunpack.c.l.s4 1966171168
          %v1171 = vunpack.c.0.s8 %v1170
          %v1172 = vlaneseq
          %v1173 = vshrl.u32 %v1172, 7
          %v1174 = vsub.s32 %v1171, %v1173
          %v1175 = vrot.slane %v1159, %v1174
          %v1177 = vunpack.c.l.s4 1966171168
          %v1178 = vunpack.c.0.s8 %v1177
          %v1179 = vlaneseq
          %v1180 = vshrl.u32 %v1179, 7
          %v1181 = vsub.s32 %v1178, %v1180
          %v1182 = vrot.slane %v1160, %v1181
          %v1184 = vunpack.c.l.s4 1966171168
          %v1185 = vunpack.c.0.s8 %v1184
          %v1186 = vlaneseq
          %v1187 = vshrl.u32 %v1186, 7
          %v1188 = vsub.s32 %v1185, %v1187
          %v1189 = vrot.slane %v1161, %v1188
          %v1190 = vcombine.low %v1168, %v1175
          %v1191 = vcombine.low %v1182, %v1189
          %v1193 = vunpack.c.l.s4 1966171168
          %v1194 = vunpack.c.0.s8 %v1193
          %v1195 = vlaneseq
          %v1196 = vshrl.u32 %v1195, 7
          %v1197 = vsub.s32 %v1194, %v1196
          %v1198 = vrot.slane %v1190, %v1197
          %v1200 = vunpack.c.l.s4 1966171168
          %v1201 = vunpack.c.0.s8 %v1200
          %v1202 = vlaneseq
          %v1203 = vshrl.u32 %v1202, 7
          %v1204 = vsub.s32 %v1201, %v1203
          %v1205 = vrot.slane %v1191, %v1204
          %v1206 = vcombine.low %v1198, %v1205
          %v1207 = vcombine.low %v1065, %v1069
          %v1208 = vcombine.low %v1073, %v1077
          %v1209 = vcombine.low %v1081, %v1085
          %v1210 = vcombine.low %v1089, %v1093
          %v1212 = vunpack.c.l.s4 1966171168
          %v1213 = vunpack.c.0.s8 %v1212
          %v1214 = vlaneseq
          %v1215 = vshrl.u32 %v1214, 7
          %v1216 = vsub.s32 %v1213, %v1215
          %v1217 = vrot.slane %v1207, %v1216
          %v1219 = vunpack.c.l.s4 1966171168
          %v1220 = vunpack.c.0.s8 %v1219
          %v1221 = vlaneseq
          %v1222 = vshrl.u32 %v1221, 7
          %v1223 = vsub.s32 %v1220, %v1222
          %v1224 = vrot.slane %v1208, %v1223
          %v1226 = vunpack.c.l.s4 1966171168
          %v1227 = vunpack.c.0.s8 %v1226
          %v1228 = vlaneseq
          %v1229 = vshrl.u32 %v1228, 7
          %v1230 = vsub.s32 %v1227, %v1229
          %v1231 = vrot.slane %v1209, %v1230
          %v1233 = vunpack.c.l.s4 1966171168
          %v1234 = vunpack.c.0.s8 %v1233
          %v1235 = vlaneseq
          %v1236 = vshrl.u32 %v1235, 7
          %v1237 = vsub.s32 %v1234, %v1236
          %v1238 = vrot.slane %v1210, %v1237
          %v1239 = vcombine.low %v1217, %v1224
          %v1240 = vcombine.low %v1231, %v1238
          %v1242 = vunpack.c.l.s4 1966171168
          %v1243 = vunpack.c.0.s8 %v1242
          %v1244 = vlaneseq
          %v1245 = vshrl.u32 %v1244, 7
          %v1246 = vsub.s32 %v1243, %v1245
          %v1247 = vrot.slane %v1239, %v1246
          %v1249 = vunpack.c.l.s4 1966171168
          %v1250 = vunpack.c.0.s8 %v1249
          %v1251 = vlaneseq
          %v1252 = vshrl.u32 %v1251, 7
          %v1253 = vsub.s32 %v1250, %v1252
          %v1254 = vrot.slane %v1240, %v1253
          %v1255 = vcombine.low %v1247, %v1254
          %v1256 = vcombine.low %v1097, %v1101
          %v1257 = vcombine.low %v1105, %v1109
          %v1258 = vcombine.low %v1113, %v1117
          %v1259 = vcombine.low %v1121, %v1125
          %v1261 = vunpack.c.l.s4 1966171168
          %v1262 = vunpack.c.0.s8 %v1261
          %v1263 = vlaneseq
          %v1264 = vshrl.u32 %v1263, 7
          %v1265 = vsub.s32 %v1262, %v1264
          %v1266 = vrot.slane %v1256, %v1265
          %v1268 = vunpack.c.l.s4 1966171168
          %v1269 = vunpack.c.0.s8 %v1268
          %v1270 = vlaneseq
          %v1271 = vshrl.u32 %v1270, 7
          %v1272 = vsub.s32 %v1269, %v1271
          %v1273 = vrot.slane %v1257, %v1272
          %v1275 = vunpack.c.l.s4 1966171168
          %v1276 = vunpack.c.0.s8 %v1275
          %v1277 = vlaneseq
          %v1278 = vshrl.u32 %v1277, 7
          %v1279 = vsub.s32 %v1276, %v1278
          %v1280 = vrot.slane %v1258, %v1279
          %v1282 = vunpack.c.l.s4 1966171168
          %v1283 = vunpack.c.0.s8 %v1282
          %v1284 = vlaneseq
          %v1285 = vshrl.u32 %v1284, 7
          %v1286 = vsub.s32 %v1283, %v1285
          %v1287 = vrot.slane %v1259, %v1286
          %v1288 = vcombine.low %v1266, %v1273
          %v1289 = vcombine.low %v1280, %v1287
          %v1291 = vunpack.c.l.s4 1966171168
          %v1292 = vunpack.c.0.s8 %v1291
          %v1293 = vlaneseq
          %v1294 = vshrl.u32 %v1293, 7
          %v1295 = vsub.s32 %v1292, %v1294
          %v1296 = vrot.slane %v1288, %v1295
          %v1298 = vunpack.c.l.s4 1966171168
          %v1299 = vunpack.c.0.s8 %v1298
          %v1300 = vlaneseq
          %v1301 = vshrl.u32 %v1300, 7
          %v1302 = vsub.s32 %v1299, %v1301
          %v1303 = vrot.slane %v1289, %v1302
          %v1304 = vcombine.low %v1296, %v1303
          %v1305 = vcombine.low %v1129, %v1133
          %v1306 = vcombine.low %v1137, %v1141
          %v1307 = vcombine.low %v1145, %v1149
          %v1308 = vcombine.low %v1153, %v1157
          %v1310 = vunpack.c.l.s4 1966171168
          %v1311 = vunpack.c.0.s8 %v1310
          %v1312 = vlaneseq
          %v1313 = vshrl.u32 %v1312, 7
          %v1314 = vsub.s32 %v1311, %v1313
          %v1315 = vrot.slane %v1305, %v1314
          %v1317 = vunpack.c.l.s4 1966171168
          %v1318 = vunpack.c.0.s8 %v1317
          %v1319 = vlaneseq
          %v1320 = vshrl.u32 %v1319, 7
          %v1321 = vsub.s32 %v1318, %v1320
          %v1322 = vrot.slane %v1306, %v1321
          %v1324 = vunpack.c.l.s4 1966171168
          %v1325 = vunpack.c.0.s8 %v1324
          %v1326 = vlaneseq
          %v1327 = vshrl.u32 %v1326, 7
          %v1328 = vsub.s32 %v1325, %v1327
          %v1329 = vrot.slane %v1307, %v1328
          %v1331 = vunpack.c.l.s4 1966171168
          %v1332 = vunpack.c.0.s8 %v1331
          %v1333 = vlaneseq
          %v1334 = vshrl.u32 %v1333, 7
          %v1335 = vsub.s32 %v1332, %v1334
          %v1336 = vrot.slane %v1308, %v1335
          %v1337 = vcombine.low %v1315, %v1322
          %v1338 = vcombine.low %v1329, %v1336
          %v1340 = vunpack.c.l.s4 1966171168
          %v1341 = vunpack.c.0.s8 %v1340
          %v1342 = vlaneseq
          %v1343 = vshrl.u32 %v1342, 7
          %v1344 = vsub.s32 %v1341, %v1343
          %v1345 = vrot.slane %v1337, %v1344
          %v1347 = vunpack.c.l.s4 1966171168
          %v1348 = vunpack.c.0.s8 %v1347
          %v1349 = vlaneseq
          %v1350 = vshrl.u32 %v1349, 7
          %v1351 = vsub.s32 %v1348, %v1350
          %v1352 = vrot.slane %v1338, %v1351
          %v1353 = vcombine.low %v1345, %v1352
          %1354 = vset.pattern.permute.xlu0 0
          %1355 = vperm.xlu0 %1354, %v1206
          %v1356 = vpop.permute.xlu0 %1355
          %1357 = vset.pattern.permute.xlu0 0
          %1358 = vperm.xlu0 %1357, %v1255
          %v1359 = vpop.permute.xlu0 %1358
          %1360 = vset.pattern.permute.xlu0 0
          %1361 = vperm.xlu0 %1360, %v1304
          %v1362 = vpop.permute.xlu0 %1361
          %1363 = vset.pattern.permute.xlu0 0
          %1364 = vperm.xlu0 %1363, %v1353
          %v1365 = vpop.permute.xlu0 %1364
          %v1366 = vlaneseq
          %v1367 = vshrl.u32 %v1366, 7
          %v1368 = vsub.s32 %v1003, %v1367
          %v1369 = vrot.slane %v1356, %v1368
          %v1370 = vadd.s32 %v1003, 4294967288
          %v1371 = vlaneseq
          %v1372 = vshrl.u32 %v1371, 7
          %v1373 = vsub.s32 %v1370, %v1372
          %v1374 = vrot.slane %v1359, %v1373
          %vm1375 = vcmask 130112
          %v1376 = vsel %vm1375, %v1374, %v1369
          %v1377 = vadd.s32 %v1003, 4294967280
          %v1378 = vlaneseq
          %v1379 = vshrl.u32 %v1378, 7
          %v1380 = vsub.s32 %v1377, %v1379
          %v1381 = vrot.slane %v1362, %v1380
          %vm1382 = vcmask 195712
          %v1383 = vsel %vm1382, %v1381, %v1376
          %v1384 = vadd.s32 %v1003, 4294967272
          %v1385 = vlaneseq
          %v1386 = vshrl.u32 %v1385, 7
          %v1387 = vsub.s32 %v1384, %v1386
          %v1388 = vrot.slane %v1365, %v1387
          %vm1389 = vcmask 261312
          %v1390 = vsel %vm1389, %v1388, %v1383
          %v1392 = vunpack.c.l.s4 1966171168
          %v1393 = vunpack.c.0.s8 %v1392
          %v1394 = vlaneseq
          %v1395 = vshrl.u32 %v1394, 7
          %v1396 = vsub.s32 %v1393, %v1395
          %v1397 = vrot.slane %v1390, %v1396
          %v1399 = vunpack.c.l.s4 1966171168
          %v1400 = vunpack.c.0.s8 %v1399
          %v1401 = vlaneseq
          %v1402 = vshrl.u32 %v1401, 7
          %v1403 = vsub.s32 %v1400, %v1402
          %v1404 = vrot.slane %v1397, %v1403
          %v1406 = vadd.f32 %v1017, %v1404
          %vm1407 = vcmask 253952
          %1408 = vst.msk [vmem:[#allocation2] sm:$0x1] %vm1407, %v1406
          %v1409 = vld [vmem:[#allocation3] sm:$0x1]
          %1410 = vmax.xlane.f32.xlu0 %v1013
          %v1411 = vpop.xlane.xlu0 %1410
          %1412 = vmax.xlane.f32.xlu0 %v1014
          %v1413 = vpop.xlane.xlu0 %1412
          %1414 = vmax.xlane.f32.xlu0 %v1015
          %v1415 = vpop.xlane.xlu0 %1414
          %1416 = vmax.xlane.f32.xlu0 %v1016
          %v1417 = vpop.xlane.xlu0 %1416
          %v1422 = vlaneseq
          %v1423 = vshrl.u32 %v1422, 7
          %v1424 = vsub.s32 0, %v1423
          %v1425 = vrot.slane %v1411, %v1424
          %v1426 = vlaneseq
          %v1427 = vshrl.u32 %v1426, 7
          %v1428 = vsub.s32 1, %v1427
          %v1429 = vrot.slane %v1411, %v1428
          %v1430 = vlaneseq
          %v1431 = vshrl.u32 %v1430, 7
          %v1432 = vsub.s32 2, %v1431
          %v1433 = vrot.slane %v1411, %v1432
          %v1434 = vlaneseq
          %v1435 = vshrl.u32 %v1434, 7
          %v1436 = vsub.s32 3, %v1435
          %v1437 = vrot.slane %v1411, %v1436
          %v1438 = vlaneseq
          %v1439 = vshrl.u32 %v1438, 7
          %v1440 = vsub.s32 4, %v1439
          %v1441 = vrot.slane %v1411, %v1440
          %v1442 = vlaneseq
          %v1443 = vshrl.u32 %v1442, 7
          %v1444 = vsub.s32 5, %v1443
          %v1445 = vrot.slane %v1411, %v1444
          %v1446 = vlaneseq
          %v1447 = vshrl.u32 %v1446, 7
          %v1448 = vsub.s32 6, %v1447
          %v1449 = vrot.slane %v1411, %v1448
          %v1450 = vlaneseq
          %v1451 = vshrl.u32 %v1450, 7
          %v1452 = vsub.s32 7, %v1451
          %v1453 = vrot.slane %v1411, %v1452
          %v1454 = vlaneseq
          %v1455 = vshrl.u32 %v1454, 7
          %v1456 = vsub.s32 0, %v1455
          %v1457 = vrot.slane %v1413, %v1456
          %v1458 = vlaneseq
          %v1459 = vshrl.u32 %v1458, 7
          %v1460 = vsub.s32 1, %v1459
          %v1461 = vrot.slane %v1413, %v1460
          %v1462 = vlaneseq
          %v1463 = vshrl.u32 %v1462, 7
          %v1464 = vsub.s32 2, %v1463
          %v1465 = vrot.slane %v1413, %v1464
          %v1466 = vlaneseq
          %v1467 = vshrl.u32 %v1466, 7
          %v1468 = vsub.s32 3, %v1467
          %v1469 = vrot.slane %v1413, %v1468
          %v1470 = vlaneseq
          %v1471 = vshrl.u32 %v1470, 7
          %v1472 = vsub.s32 4, %v1471
          %v1473 = vrot.slane %v1413, %v1472
          %v1474 = vlaneseq
          %v1475 = vshrl.u32 %v1474, 7
          %v1476 = vsub.s32 5, %v1475
          %v1477 = vrot.slane %v1413, %v1476
          %v1478 = vlaneseq
          %v1479 = vshrl.u32 %v1478, 7
          %v1480 = vsub.s32 6, %v1479
          %v1481 = vrot.slane %v1413, %v1480
          %v1482 = vlaneseq
          %v1483 = vshrl.u32 %v1482, 7
          %v1484 = vsub.s32 7, %v1483
          %v1485 = vrot.slane %v1413, %v1484
          %v1486 = vlaneseq
          %v1487 = vshrl.u32 %v1486, 7
          %v1488 = vsub.s32 0, %v1487
          %v1489 = vrot.slane %v1415, %v1488
          %v1490 = vlaneseq
          %v1491 = vshrl.u32 %v1490, 7
          %v1492 = vsub.s32 1, %v1491
          %v1493 = vrot.slane %v1415, %v1492
          %v1494 = vlaneseq
          %v1495 = vshrl.u32 %v1494, 7
          %v1496 = vsub.s32 2, %v1495
          %v1497 = vrot.slane %v1415, %v1496
          %v1498 = vlaneseq
          %v1499 = vshrl.u32 %v1498, 7
          %v1500 = vsub.s32 3, %v1499
          %v1501 = vrot.slane %v1415, %v1500
          %v1502 = vlaneseq
          %v1503 = vshrl.u32 %v1502, 7
          %v1504 = vsub.s32 4, %v1503
          %v1505 = vrot.slane %v1415, %v1504
          %v1506 = vlaneseq
          %v1507 = vshrl.u32 %v1506, 7
          %v1508 = vsub.s32 5, %v1507
          %v1509 = vrot.slane %v1415, %v1508
          %v1510 = vlaneseq
          %v1511 = vshrl.u32 %v1510, 7
          %v1512 = vsub.s32 6, %v1511
          %v1513 = vrot.slane %v1415, %v1512
          %v1514 = vlaneseq
          %v1515 = vshrl.u32 %v1514, 7
          %v1516 = vsub.s32 7, %v1515
          %v1517 = vrot.slane %v1415, %v1516
          %v1518 = vlaneseq
          %v1519 = vshrl.u32 %v1518, 7
          %v1520 = vsub.s32 0, %v1519
          %v1521 = vrot.slane %v1417, %v1520
          %v1522 = vlaneseq
          %v1523 = vshrl.u32 %v1522, 7
          %v1524 = vsub.s32 1, %v1523
          %v1525 = vrot.slane %v1417, %v1524
          %v1526 = vlaneseq
          %v1527 = vshrl.u32 %v1526, 7
          %v1528 = vsub.s32 2, %v1527
          %v1529 = vrot.slane %v1417, %v1528
          %v1530 = vlaneseq
          %v1531 = vshrl.u32 %v1530, 7
          %v1532 = vsub.s32 3, %v1531
          %v1533 = vrot.slane %v1417, %v1532
          %v1534 = vlaneseq
          %v1535 = vshrl.u32 %v1534, 7
          %v1536 = vsub.s32 4, %v1535
          %v1537 = vrot.slane %v1417, %v1536
          %v1538 = vlaneseq
          %v1539 = vshrl.u32 %v1538, 7
          %v1540 = vsub.s32 5, %v1539
          %v1541 = vrot.slane %v1417, %v1540
          %v1542 = vlaneseq
          %v1543 = vshrl.u32 %v1542, 7
          %v1544 = vsub.s32 6, %v1543
          %v1545 = vrot.slane %v1417, %v1544
          %v1546 = vlaneseq
          %v1547 = vshrl.u32 %v1546, 7
          %v1548 = vsub.s32 7, %v1547
          %v1549 = vrot.slane %v1417, %v1548
          %v1550 = vcombine.low %v1425, %v1429
          %v1551 = vcombine.low %v1433, %v1437
          %v1552 = vcombine.low %v1441, %v1445
          %v1553 = vcombine.low %v1449, %v1453
          %v1555 = vunpack.c.l.s4 1966171168
          %v1556 = vunpack.c.0.s8 %v1555
          %v1557 = vlaneseq
          %v1558 = vshrl.u32 %v1557, 7
          %v1559 = vsub.s32 %v1556, %v1558
          %v1560 = vrot.slane %v1550, %v1559
          %v1562 = vunpack.c.l.s4 1966171168
          %v1563 = vunpack.c.0.s8 %v1562
          %v1564 = vlaneseq
          %v1565 = vshrl.u32 %v1564, 7
          %v1566 = vsub.s32 %v1563, %v1565
          %v1567 = vrot.slane %v1551, %v1566
          %v1569 = vunpack.c.l.s4 1966171168
          %v1570 = vunpack.c.0.s8 %v1569
          %v1571 = vlaneseq
          %v1572 = vshrl.u32 %v1571, 7
          %v1573 = vsub.s32 %v1570, %v1572
          %v1574 = vrot.slane %v1552, %v1573
          %v1576 = vunpack.c.l.s4 1966171168
          %v1577 = vunpack.c.0.s8 %v1576
          %v1578 = vlaneseq
          %v1579 = vshrl.u32 %v1578, 7
          %v1580 = vsub.s32 %v1577, %v1579
          %v1581 = vrot.slane %v1553, %v1580
          %v1582 = vcombine.low %v1560, %v1567
          %v1583 = vcombine.low %v1574, %v1581
          %v1585 = vunpack.c.l.s4 1966171168
          %v1586 = vunpack.c.0.s8 %v1585
          %v1587 = vlaneseq
          %v1588 = vshrl.u32 %v1587, 7
          %v1589 = vsub.s32 %v1586, %v1588
          %v1590 = vrot.slane %v1582, %v1589
          %v1592 = vunpack.c.l.s4 1966171168
          %v1593 = vunpack.c.0.s8 %v1592
          %v1594 = vlaneseq
          %v1595 = vshrl.u32 %v1594, 7
          %v1596 = vsub.s32 %v1593, %v1595
          %v1597 = vrot.slane %v1583, %v1596
          %v1598 = vcombine.low %v1590, %v1597
          %v1599 = vcombine.low %v1457, %v1461
          %v1600 = vcombine.low %v1465, %v1469
          %v1601 = vcombine.low %v1473, %v1477
          %v1602 = vcombine.low %v1481, %v1485
          %v1604 = vunpack.c.l.s4 1966171168
          %v1605 = vunpack.c.0.s8 %v1604
          %v1606 = vlaneseq
          %v1607 = vshrl.u32 %v1606, 7
          %v1608 = vsub.s32 %v1605, %v1607
          %v1609 = vrot.slane %v1599, %v1608
          %v1611 = vunpack.c.l.s4 1966171168
          %v1612 = vunpack.c.0.s8 %v1611
          %v1613 = vlaneseq
          %v1614 = vshrl.u32 %v1613, 7
          %v1615 = vsub.s32 %v1612, %v1614
          %v1616 = vrot.slane %v1600, %v1615
          %v1618 = vunpack.c.l.s4 1966171168
          %v1619 = vunpack.c.0.s8 %v1618
          %v1620 = vlaneseq
          %v1621 = vshrl.u32 %v1620, 7
          %v1622 = vsub.s32 %v1619, %v1621
          %v1623 = vrot.slane %v1601, %v1622
          %v1625 = vunpack.c.l.s4 1966171168
          %v1626 = vunpack.c.0.s8 %v1625
          %v1627 = vlaneseq
          %v1628 = vshrl.u32 %v1627, 7
          %v1629 = vsub.s32 %v1626, %v1628
          %v1630 = vrot.slane %v1602, %v1629
          %v1631 = vcombine.low %v1609, %v1616
          %v1632 = vcombine.low %v1623, %v1630
          %v1634 = vunpack.c.l.s4 1966171168
          %v1635 = vunpack.c.0.s8 %v1634
          %v1636 = vlaneseq
          %v1637 = vshrl.u32 %v1636, 7
          %v1638 = vsub.s32 %v1635, %v1637
          %v1639 = vrot.slane %v1631, %v1638
          %v1641 = vunpack.c.l.s4 1966171168
          %v1642 = vunpack.c.0.s8 %v1641
          %v1643 = vlaneseq
          %v1644 = vshrl.u32 %v1643, 7
          %v1645 = vsub.s32 %v1642, %v1644
          %v1646 = vrot.slane %v1632, %v1645
          %v1647 = vcombine.low %v1639, %v1646
          %v1648 = vcombine.low %v1489, %v1493
          %v1649 = vcombine.low %v1497, %v1501
          %v1650 = vcombine.low %v1505, %v1509
          %v1651 = vcombine.low %v1513, %v1517
          %v1653 = vunpack.c.l.s4 1966171168
          %v1654 = vunpack.c.0.s8 %v1653
          %v1655 = vlaneseq
          %v1656 = vshrl.u32 %v1655, 7
          %v1657 = vsub.s32 %v1654, %v1656
          %v1658 = vrot.slane %v1648, %v1657
          %v1660 = vunpack.c.l.s4 1966171168
          %v1661 = vunpack.c.0.s8 %v1660
          %v1662 = vlaneseq
          %v1663 = vshrl.u32 %v1662, 7
          %v1664 = vsub.s32 %v1661, %v1663
          %v1665 = vrot.slane %v1649, %v1664
          %v1667 = vunpack.c.l.s4 1966171168
          %v1668 = vunpack.c.0.s8 %v1667
          %v1669 = vlaneseq
          %v1670 = vshrl.u32 %v1669, 7
          %v1671 = vsub.s32 %v1668, %v1670
          %v1672 = vrot.slane %v1650, %v1671
          %v1674 = vunpack.c.l.s4 1966171168
          %v1675 = vunpack.c.0.s8 %v1674
          %v1676 = vlaneseq
          %v1677 = vshrl.u32 %v1676, 7
          %v1678 = vsub.s32 %v1675, %v1677
          %v1679 = vrot.slane %v1651, %v1678
          %v1680 = vcombine.low %v1658, %v1665
          %v1681 = vcombine.low %v1672, %v1679
          %v1683 = vunpack.c.l.s4 1966171168
          %v1684 = vunpack.c.0.s8 %v1683
          %v1685 = vlaneseq
          %v1686 = vshrl.u32 %v1685, 7
          %v1687 = vsub.s32 %v1684, %v1686
          %v1688 = vrot.slane %v1680, %v1687
          %v1690 = vunpack.c.l.s4 1966171168
          %v1691 = vunpack.c.0.s8 %v1690
          %v1692 = vlaneseq
          %v1693 = vshrl.u32 %v1692, 7
          %v1694 = vsub.s32 %v1691, %v1693
          %v1695 = vrot.slane %v1681, %v1694
          %v1696 = vcombine.low %v1688, %v1695
          %v1697 = vcombine.low %v1521, %v1525
          %v1698 = vcombine.low %v1529, %v1533
          %v1699 = vcombine.low %v1537, %v1541
          %v1700 = vcombine.low %v1545, %v1549
          %v1702 = vunpack.c.l.s4 1966171168
          %v1703 = vunpack.c.0.s8 %v1702
          %v1704 = vlaneseq
          %v1705 = vshrl.u32 %v1704, 7
          %v1706 = vsub.s32 %v1703, %v1705
          %v1707 = vrot.slane %v1697, %v1706
          %v1709 = vunpack.c.l.s4 1966171168
          %v1710 = vunpack.c.0.s8 %v1709
          %v1711 = vlaneseq
          %v1712 = vshrl.u32 %v1711, 7
          %v1713 = vsub.s32 %v1710, %v1712
          %v1714 = vrot.slane %v1698, %v1713
          %v1716 = vunpack.c.l.s4 1966171168
          %v1717 = vunpack.c.0.s8 %v1716
          %v1718 = vlaneseq
          %v1719 = vshrl.u32 %v1718, 7
          %v1720 = vsub.s32 %v1717, %v1719
          %v1721 = vrot.slane %v1699, %v1720
          %v1723 = vunpack.c.l.s4 1966171168
          %v1724 = vunpack.c.0.s8 %v1723
          %v1725 = vlaneseq
          %v1726 = vshrl.u32 %v1725, 7
          %v1727 = vsub.s32 %v1724, %v1726
          %v1728 = vrot.slane %v1700, %v1727
          %v1729 = vcombine.low %v1707, %v1714
          %v1730 = vcombine.low %v1721, %v1728
          %v1732 = vunpack.c.l.s4 1966171168
          %v1733 = vunpack.c.0.s8 %v1732
          %v1734 = vlaneseq
          %v1735 = vshrl.u32 %v1734, 7
          %v1736 = vsub.s32 %v1733, %v1735
          %v1737 = vrot.slane %v1729, %v1736
          %v1739 = vunpack.c.l.s4 1966171168
          %v1740 = vunpack.c.0.s8 %v1739
          %v1741 = vlaneseq
          %v1742 = vshrl.u32 %v1741, 7
          %v1743 = vsub.s32 %v1740, %v1742
          %v1744 = vrot.slane %v1730, %v1743
          %v1745 = vcombine.low %v1737, %v1744
          %1746 = vset.pattern.permute.xlu0 0
          %1747 = vperm.xlu0 %1746, %v1598
          %v1748 = vpop.permute.xlu0 %1747
          %1749 = vset.pattern.permute.xlu0 0
          %1750 = vperm.xlu0 %1749, %v1647
          %v1751 = vpop.permute.xlu0 %1750
          %1752 = vset.pattern.permute.xlu0 0
          %1753 = vperm.xlu0 %1752, %v1696
          %v1754 = vpop.permute.xlu0 %1753
          %1755 = vset.pattern.permute.xlu0 0
          %1756 = vperm.xlu0 %1755, %v1745
          %v1757 = vpop.permute.xlu0 %1756
          %v1758 = vlaneseq
          %v1759 = vshrl.u32 %v1758, 7
          %v1760 = vsub.s32 %v1003, %v1759
          %v1761 = vrot.slane %v1748, %v1760
          %v1762 = vlaneseq
          %v1763 = vshrl.u32 %v1762, 7
          %v1764 = vsub.s32 %v1370, %v1763
          %v1765 = vrot.slane %v1751, %v1764
          %v1766 = vsel %vm1375, %v1765, %v1761
          %v1767 = vlaneseq
          %v1768 = vshrl.u32 %v1767, 7
          %v1769 = vsub.s32 %v1377, %v1768
          %v1770 = vrot.slane %v1754, %v1769
          %v1771 = vsel %vm1382, %v1770, %v1766
          %v1772 = vlaneseq
          %v1773 = vshrl.u32 %v1772, 7
          %v1774 = vsub.s32 %v1384, %v1773
          %v1775 = vrot.slane %v1757, %v1774
          %v1776 = vsel %vm1389, %v1775, %v1771
          %v1778 = vunpack.c.l.s4 1966171168
          %v1779 = vunpack.c.0.s8 %v1778
          %v1780 = vlaneseq
          %v1781 = vshrl.u32 %v1780, 7
          %v1782 = vsub.s32 %v1779, %v1781
          %v1783 = vrot.slane %v1776, %v1782
          %v1785 = vunpack.c.l.s4 1966171168
          %v1786 = vunpack.c.0.s8 %v1785
          %v1787 = vlaneseq
          %v1788 = vshrl.u32 %v1787, 7
          %v1789 = vsub.s32 %v1786, %v1788
          %v1790 = vrot.slane %v1783, %v1789
          %v1792 = vmax.f32 %v1409, %v1790
          %1793 = vst.msk [vmem:[#allocation3] sm:$0x1] %vm1407, %v1792
          %v1794 = vld [vmem:[#allocation2] sm:$0x1]
          %v1795 = vmul.f32 %v1794, 0.0034722222
          %v1796 = vld [vmem:[#allocation3] sm:$0x1]
          %v1798 = vlaneseq
          %v1799 = vshrl.u32 %v1798, 7
          %v1800 = vsub.s32 0, %v1799
          %v1801 = vrot.slane %v1796, %v1800
          %vm1803 = vcmask 1040384
          %v1804 = vsel %vm1803, %v1795, %v1801
          %v1805 = vld [vmem:[%s1] sm:$0x3]
          %v1806 = vld [vmem:[%s2] sm:$0xff]
          %v1807 = vld [vmem:[%s2 + $0x8] sm:$0xff]
          %v1808 = vld [vmem:[%s2 + $0x10] sm:$0xff]
          %v1809 = vld [vmem:[%s2 + $0x18] sm:$0xff]
          %vm1810 = vcmask 261120
          %v1812 = vsel %vm1810, %v1804, 0
          %v1815 = vsel %vm1810, %v1805, 0
          %1817 = vmatprep.subr.mxu0 0.0
          %1818 = vmatpush1.xpose.msra.mxu0 %v1815
          %1819 = vmatprep.subr.mxu0 0.0
          %1820 = vmatpush1.xpose.msra.mxu0 0.0
          %1821 = vmatprep.subr.mxu0 0.0
          %1822 = vmatpush1.xpose.msra.mxu0 0.0
          %1823 = vmatprep.subr.mxu0 0.0
          %1824 = vmatpush1.xpose.msra.mxu0 0.0
          %1825 = vmatprep.subr.mxu0 0.0
          %1826 = vmatpush1.xpose.msra.mxu0 0.0
          %1827 = vmatprep.subr.mxu0 0.0
          %1828 = vmatpush1.xpose.msra.mxu0 0.0
          %1829 = vmatprep.subr.mxu0 0.0
          %1830 = vmatpush1.xpose.msra.mxu0 0.0
          %1831 = vmatprep.subr.mxu0 0.0
          %1832 = vmatpush1.xpose.msra.mxu0 0.0
          %1833 = vmatprep.subr.mxu0 0.0
          %1834 = vmatpush1.xpose.msra.mxu0 0.0
          %1835 = vmatprep.subr.mxu0 0.0
          %1836 = vmatpush1.xpose.msra.mxu0 0.0
          %1837 = vmatprep.subr.mxu0 0.0
          %1838 = vmatpush1.xpose.msra.mxu0 0.0
          %1839 = vmatprep.subr.mxu0 0.0
          %1840 = vmatpush1.xpose.msra.mxu0 0.0
          %1841 = vmatprep.subr.mxu0 0.0
          %1842 = vmatpush1.xpose.msra.mxu0 0.0
          %1843 = vmatprep.subr.mxu0 0.0
          %1844 = vmatpush1.xpose.msra.mxu0 0.0
          %1845 = vmatprep.subr.mxu0 0.0
          %1846 = vmatpush1.xpose.msra.mxu0 0.0
          %1847 = vmatprep.subr.mxu0 0.0
          %1848 = vmatpush1.xpose.msra.mxu0 0.0
          %1849 = vmatprep.subr.mxu0 0.0
          %1850 = vmatpush1.xpose.msra.mxu0 0.0
          %1851 = vmatprep.subr.mxu0 0.0
          %1852 = vmatpush1.xpose.msra.mxu0 0.0
          %1853 = vmatprep.subr.mxu0 0.0
          %1854 = vmatpush1.xpose.msra.mxu0 0.0
          %1855 = vmatprep.subr.mxu0 0.0
          %1856 = vmatpush1.xpose.msra.mxu0 0.0
          %1857 = vmatprep.subr.mxu0 0.0
          %1858 = vmatpush1.xpose.msra.mxu0 0.0
          %1859 = vmatprep.subr.mxu0 0.0
          %1860 = vmatpush1.xpose.msra.mxu0 0.0
          %1861 = vmatprep.subr.mxu0 0.0
          %1862 = vmatpush1.xpose.msra.mxu0 0.0
          %1863 = vmatprep.subr.mxu0 0.0
          %1864 = vmatpush1.xpose.msra.mxu0 0.0
          %1865 = vmatprep.subr.mxu0 0.0
          %1866 = vmatpush1.xpose.msra.mxu0 0.0
          %1867 = vmatprep.subr.mxu0 0.0
          %1868 = vmatpush1.xpose.msra.mxu0 0.0
          %1869 = vmatprep.subr.mxu0 0.0
          %1870 = vmatpush1.xpose.msra.mxu0 0.0
          %1871 = vmatprep.subr.mxu0 0.0
          %1872 = vmatpush1.xpose.msra.mxu0 0.0
          %1873 = vmatprep.subr.mxu0 0.0
          %1874 = vmatpush1.xpose.msra.mxu0 0.0
          %1875 = vmatprep.subr.mxu0 0.0
          %1876 = vmatpush1.xpose.msra.mxu0 0.0
          %1877 = vmatprep.subr.mxu0 0.0
          %1878 = vmatpush1.xpose.msra.mxu0 0.0
          %1879 = vmatprep.subr.mxu0 0.0
          %1880 = vmatpush1.xpose.msra.mxu0 0.0
          %1881 = vmatprep.mubr.f32.mxu0 0.0
          %1882 = vmatmul.mubr.f32.gmra.mrb[0].mxu0 %v1812
          %v1883 = vpop.f32.mrb[0].mxu0
          %v1884 = vadd.f32 0.0, %v1883
          %v1885 = vpop.f32.mrb[0].mxu0
          %1886 = vdwg.mxu0
          %v1887 = vmax.f32 %v1884, 0.0
          %vm1888 = vcmask 15360
          %v1890 = vsel %vm1888, %v1887, 0
          %v1893 = vsel %vm1888, %v1806, 0
          %v1896 = vsel %vm1888, %v1807, 0
          %v1899 = vsel %vm1888, %v1808, 0
          %v1902 = vsel %vm1888, %v1809, 0
          %1904 = vmatprep.subr.mxu0 0.0
          %1905 = vmatpush1.xpose.msra.mxu0 %v1893
          %1906 = vmatprep.subr.mxu0 0.0
          %1907 = vmatpush1.xpose.msra.mxu0 %v1896
          %1908 = vmatprep.subr.mxu0 0.0
          %1909 = vmatpush1.xpose.msra.mxu0 %v1899
          %1910 = vmatprep.subr.mxu0 0.0
          %1911 = vmatpush1.xpose.msra.mxu0 %v1902
          %1912 = vmatprep.subr.mxu0 0.0
          %1913 = vmatpush1.xpose.msra.mxu0 0.0
          %1914 = vmatprep.subr.mxu0 0.0
          %1915 = vmatpush1.xpose.msra.mxu0 0.0
          %1916 = vmatprep.subr.mxu0 0.0
          %1917 = vmatpush1.xpose.msra.mxu0 0.0
          %1918 = vmatprep.subr.mxu0 0.0
          %1919 = vmatpush1.xpose.msra.mxu0 0.0
          %1920 = vmatprep.subr.mxu0 0.0
          %1921 = vmatpush1.xpose.msra.mxu0 0.0
          %1922 = vmatprep.subr.mxu0 0.0
          %1923 = vmatpush1.xpose.msra.mxu0 0.0
          %1924 = vmatprep.subr.mxu0 0.0
          %1925 = vmatpush1.xpose.msra.mxu0 0.0
          %1926 = vmatprep.subr.mxu0 0.0
          %1927 = vmatpush1.xpose.msra.mxu0 0.0
          %1928 = vmatprep.subr.mxu0 0.0
          %1929 = vmatpush1.xpose.msra.mxu0 0.0
          %1930 = vmatprep.subr.mxu0 0.0
          %1931 = vmatpush1.xpose.msra.mxu0 0.0
          %1932 = vmatprep.subr.mxu0 0.0
          %1933 = vmatpush1.xpose.msra.mxu0 0.0
          %1934 = vmatprep.subr.mxu0 0.0
          %1935 = vmatpush1.xpose.msra.mxu0 0.0
          %1936 = vmatprep.subr.mxu0 0.0
          %1937 = vmatpush1.xpose.msra.mxu0 0.0
          %1938 = vmatprep.subr.mxu0 0.0
          %1939 = vmatpush1.xpose.msra.mxu0 0.0
          %1940 = vmatprep.subr.mxu0 0.0
          %1941 = vmatpush1.xpose.msra.mxu0 0.0
          %1942 = vmatprep.subr.mxu0 0.0
          %1943 = vmatpush1.xpose.msra.mxu0 0.0
          %1944 = vmatprep.subr.mxu0 0.0
          %1945 = vmatpush1.xpose.msra.mxu0 0.0
          %1946 = vmatprep.subr.mxu0 0.0
          %1947 = vmatpush1.xpose.msra.mxu0 0.0
          %1948 = vmatprep.subr.mxu0 0.0
          %1949 = vmatpush1.xpose.msra.mxu0 0.0
          %1950 = vmatprep.subr.mxu0 0.0
          %1951 = vmatpush1.xpose.msra.mxu0 0.0
          %1952 = vmatprep.subr.mxu0 0.0
          %1953 = vmatpush1.xpose.msra.mxu0 0.0
          %1954 = vmatprep.subr.mxu0 0.0
          %1955 = vmatpush1.xpose.msra.mxu0 0.0
          %1956 = vmatprep.subr.mxu0 0.0
          %1957 = vmatpush1.xpose.msra.mxu0 0.0
          %1958 = vmatprep.subr.mxu0 0.0
          %1959 = vmatpush1.xpose.msra.mxu0 0.0
          %1960 = vmatprep.subr.mxu0 0.0
          %1961 = vmatpush1.xpose.msra.mxu0 0.0
          %1962 = vmatprep.subr.mxu0 0.0
          %1963 = vmatpush1.xpose.msra.mxu0 0.0
          %1964 = vmatprep.subr.mxu0 0.0
          %1965 = vmatpush1.xpose.msra.mxu0 0.0
          %1966 = vmatprep.subr.mxu0 0.0
          %1967 = vmatpush1.xpose.msra.mxu0 0.0
          %1968 = vmatprep.mubr.f32.mxu0 0.0
          %1969 = vmatmul.mubr.f32.gmra.mrb[0].mxu0 %v1890
          %v1970 = vpop.f32.mrb[0].mxu0
          %v1971 = vadd.f32 0.0, %v1970
          %v1972 = vpop.f32.mrb[0].mxu0
          %1973 = vdwg.mxu0
          %v1975 = vrot.slane %v1971, 1
          %v1977 = vadd.f32 %v1971, %v1975
          %v1978 = vxor.u32 %v1977, 2147483648
          %v1979 = vmul.f32 %v1978, 1.442695
          %v1980 = vpow.pop %v1979
          %v1981 = vadd.f32 %v1980, 1.0
          %v1982 = vrcp.pop %v1981
          %v1983 = vmul.f32 1.0, %v1982
          %1984 = vst.msk [vmem:[%s202] sm:$0x1] %vm1407, %v1983
        $region48: #{tpu_custom_call.1} parent=31 // pred_fallthru
          _
        %s1985 = sand.u32 %s110, 1
        %s1986 = scalar_lea.sflag [#allocation6], %s1985
        %s1987 = sand.u32 %s110, 1
        %s1988 = scalar_lea.vmem [#allocation7], %s1987
        // Predicated region
        $region49: #{tpu_custom_call.1} parent=31 // pred_check
          %p1989 = pneg %p120
        $region50: #{tpu_custom_call.1} parent=31 // pred_check_branch
          %1991 = sbr.rel (%p1989) target = $region52
        $region51: #{tpu_custom_call.1} parent=31 // pred_region
          %s1993 = ssub.s32 16, 16
          %1994 = vsyncadd %s1986, %s1993
          %s1995 = smul.addr %s24, 16
          %s1996 = scalar_lea.hbm %s3, %s1995
          %s1998 = sshll.u32 %s1988, 4
          %s1999 = int_to_ptr.vmem [resolvable:$true] %s1998
          %2001 = dma.vmem_to_hbm [thread:$0]  %s1999, 16, %s1996, %s1986
        $region52: #{tpu_custom_call.1} parent=31 // pred_fallthru
          _
      $region32: #{tpu_custom_call.1} parent=5 // pred_fallthru
        _
      %p2002 = scmp.le.s32.totalorder 2, %s15
      // Predicated region
      $region53: #{tpu_custom_call.1} parent=5 // pred_check
        %p2003 = pneg %p2002
      $region54: #{tpu_custom_call.1} parent=5 // pred_check_branch
        %2005 = sbr.rel (%p2003) target = $region56
      $region55: #{tpu_custom_call.1} parent=5 // pred_region
        %s2006 = ssub.s32 %s15, 2
        // Predicated region
        $region57: #{tpu_custom_call.1} parent=55 // pred_check
          %p2007 = pneg %p126
        $region58: #{tpu_custom_call.1} parent=55 // pred_check_branch
          %2009 = sbr.rel (%p2007) target = $region60
        $region59: #{tpu_custom_call.1} parent=55 // pred_region
          %s2010 = sand.u32 %s111, 1
          %s2011 = scalar_lea.sflag [#allocation6], %s2010
          %s2012 = sand.u32 %s111, 1
          %s2013 = scalar_lea.vmem [#allocation7], %s2012
          %2014 = dma.done %s2011, 16
        $region60: #{tpu_custom_call.1} parent=55 // pred_fallthru
          _
      $region56: #{tpu_custom_call.1} parent=5 // pred_fallthru
        _
    $region6: #{tpu_custom_call.1} parent=1 // loop_footer
      %s19 = sadd.s32 1, %s15
    $region7: #{tpu_custom_call.1} parent=1 // loop_footer_branch
      %14 = sbr.rel target = $region3
    $region8: #{tpu_custom_call.1} parent=1 // loop_exit
      _
    %2015 = vsyncpa [#allocation5], 1
    %s2016 = scalar_lea.sflag [#allocation5], 1
    %2017 = vsyncpa %s2016, 1
    %2018 = vsyncpa [#allocation6], 1
    %s2019 = scalar_lea.sflag [#allocation6], 1
    %2020 = vsyncpa %s2019, 1

</llo_original>
